<compile_context>
chip_gen: v6e
topology: v6e:2x2x1
jax: 0.10.0
libtpu: 0.0.40
codegen_flags: <defaults>
</compile_context>

<pallas_src>
import jax
import jax.numpy as jnp
from jax import lax
from jax.experimental import pallas as pl
from jax.experimental.pallas import tpu as pltpu

_MATMUL_DTYPE = jnp.bfloat16   # MXU operand dtype; accumulation stays f32.


# --------------------------------------------------------------------------------------
# Fused whole-model kernel (one batch block per grid step)
# --------------------------------------------------------------------------------------
def _make_lstm_model_kernel(num_layers, seq_len, batch_blk, hidden, unroll):
    T, Bb, H = seq_len, batch_blk, hidden
    cdt = _MATMUL_DTYPE

    def kernel(*refs):
        x_ref = refs[0]                                   # (T*Bb, D) bf16, time-major, batch inner
        lstm_refs = refs[1:1 + 3 * num_layers]            # per layer: wx (Din,4H) bf16, wh (H,4H) bf16, b (1,4H) f32
        (wfc_ref, bfc_ref, w2_ref, b2_ref,
         w3_ref, b3_ref) = refs[1 + 3 * num_layers: 7 + 3 * num_layers]
        out_ref = refs[7 + 3 * num_layers]                # (Bb, O) f32
        xproj_scr = refs[8 + 3 * num_layers]              # (T*Bb, 4H) f32 scratch
        hseq_scr = refs[9 + 3 * num_layers] if num_layers > 1 else None  # (T*Bb, H) bf16 scratch

        # ---- layer 0 input projection, hoisted out of the recurrence (one MXU matmul) ----
        xproj_scr[...] = (
            jnp.dot(x_ref[...], lstm_refs[0][...], preferred_element_type=jnp.float32)
            + lstm_refs[2][...]
        )

        h_last = jnp.zeros((Bb, H), jnp.float32)
        for layer in range(num_layers):                   # static unroll over layers
            wh_ref = lstm_refs[3 * layer + 1]             # kept as a ref; streamed from VMEM per dot
            is_last = layer == num_layers - 1

            def step(t, carry, wh_ref=wh_ref, write_seq=(not is_last)):
                h, c = carry
                off = pl.multiple_of(t * Bb, Bb)
                gates = (
                    jnp.dot(h.astype(cdt), wh_ref[...], preferred_element_type=jnp.float32)
                    + xproj_scr[pl.ds(off, Bb), :]
                )                                         # (Bb, 4H), gate order [i, f, o, g]
                sig = jax.nn.sigmoid(gates[:, :3 * H])    # one EUP dispatch covers i/f/o
                i_g = sig[:, 0 * H:1 * H]
                f_g = sig[:, 1 * H:2 * H]
                o_g = sig[:, 2 * H:3 * H]
                g_g = jnp.tanh(gates[:, 3 * H:])          # one tanh dispatch
                c_new = f_g * c + i_g * g_g
                h_new = o_g * jnp.tanh(c_new)
                if write_seq:                             # last layer: only h_last is needed
                    hseq_scr[pl.ds(off, Bb), :] = h_new.astype(cdt)
                return (h_new, c_new)

            init = (jnp.zeros((Bb, H), jnp.float32), jnp.zeros((Bb, H), jnp.float32))
            h_last, _ = lax.fori_loop(0, T, step, init, unroll=unroll)

            if not is_last:
                # Hoisted input projection for the next layer: one big matmul over the
                # full (bf16) hidden sequence just produced.
                wx_n = lstm_refs[3 * (layer + 1)]
                b_n = lstm_refs[3 * (layer + 1) + 2]
                xproj_scr[...] = (
                    jnp.dot(hseq_scr[...], wx_n[...], preferred_element_type=jnp.float32)
                    + b_n[...]
                )

        # ---- fused head: out = fc(h_last); out + W2(out^2) + W3(out^3) ----
        out = jnp.dot(h_last.astype(cdt), wfc_ref[...],
                      preferred_element_type=jnp.float32) + bfc_ref[...]
        p2 = jnp.dot((out * out).astype(cdt), w2_ref[...],
                     preferred_element_type=jnp.float32) + b2_ref[...]
        p3 = jnp.dot((out * out * out).astype(cdt), w3_ref[...],
                     preferred_element_type=jnp.float32) + b3_ref[...]
        out_ref[...] = (out + p2 + p3).astype(out_ref.dtype)

    return kernel


# --------------------------------------------------------------------------------------
# Full model forward (wrapper)
# --------------------------------------------------------------------------------------
def lstm_model_forward(x, params):
    """x: (B, T, input_size) float32, batch-first like nn.LSTM(batch_first=True)."""
    B, T, D = x.shape
    num_layers = len(params["lstm"])
    H = params["lstm"][0]["wh_t"].shape[0]
    O = params["fc"]["w_t"].shape[1]
    mdt = _MATMUL_DTYPE

    # Batch tiling: pad to the sublane width (8); grow the block toward the MXU M dim
    # (capped at 128) for larger batches; expose blocks on a "parallel" grid axis.
    Bb = min(128, ((B + 7) // 8) * 8)
    nb = -(-B // Bb)
    Bp = nb * Bb

    # Time-major, batch-padded, one contiguous (T*Bb, D) slab per batch block.
    x_tm = jnp.transpose(x, (1, 0, 2))                    # (T, B, D)
    x_tm = jnp.pad(x_tm, ((0, 0), (0, Bp - B), (0, 0)))   # (T, Bp, D)
    x_blk = (x_tm.reshape(T, nb, Bb, D)
             .transpose(1, 0, 2, 3)
             .reshape(nb, T * Bb, D)
             .astype(mdt))

    args = [x_blk]
    for lp in params["lstm"]:
        args.extend([lp["wx_t"].astype(mdt), lp["wh_t"].astype(mdt), lp["b"]])
    args.extend([params["fc"]["w_t"].astype(mdt), params["fc"]["b"],
                 params["p2"]["w_t"].astype(mdt), params["p2"]["b"],
                 params["p3"]["w_t"].astype(mdt), params["p3"]["b"]])

    in_specs = [pl.BlockSpec((None, T * Bb, D), lambda b: (b, 0, 0))]
    for a in args[1:]:                                    # all weights/biases are 2-D, full-block
        in_specs.append(pl.BlockSpec(a.shape, lambda b: (0, 0)))

    scratch_shapes = [pltpu.VMEM((T * Bb, 4 * H), jnp.float32)]   # hoisted input projection
    if num_layers > 1:
        scratch_shapes.append(pltpu.VMEM((T * Bb, H), mdt))       # bf16 inter-layer hidden seq

    # Scoped-VMEM limit sized to what this kernel actually stages (weights + double-
    # buffered block I/O + scratches + headroom), clamped to the v7x physical budget.
    itemsize = jnp.dtype(mdt).itemsize
    weight_bytes = sum(int(a.size) * a.dtype.itemsize for a in args[1:])
    io_bytes = 2 * (T * Bb * D * itemsize + Bb * O * 4)
    scratch_bytes = T * Bb * 4 * H * 4 + (T * Bb * H * itemsize if num_layers > 1 else 0)
    need = 2 * weight_bytes + io_bytes + scratch_bytes + (4 << 20)
    vmem_limit = int(min(64 << 20, max(32 << 20, need)))

    kernel = _make_lstm_model_kernel(num_layers, T, Bb, H, unroll=max(1, min(T, 8)))

    out = pl.pallas_call(
        kernel,
        out_shape=jax.ShapeDtypeStruct((Bp, O), jnp.float32),
        grid=(nb,),
        in_specs=in_specs,
        out_specs=pl.BlockSpec((Bb, O), lambda b: (b, 0)),
        scratch_shapes=scratch_shapes,
        compiler_params=pltpu.CompilerParams(
            dimension_semantics=("parallel",),
            vmem_limit_bytes=vmem_limit,
        ),
    )(*args)
    return out[:B]                                        # drop batch padding


# --------------------------------------------------------------------------------------
# Deterministic parameter init (PyTorch-style uniform(-1/sqrt(fan), 1/sqrt(fan)))
# Gate columns are reordered [i, f, g, o] -> [i, f, o, g] here, once, so the kernel can
# apply a single contiguous sigmoid over i/f/o.
# --------------------------------------------------------------------------------------
def _reorder_gate_cols(w, H):
    return jnp.concatenate([w[..., :2 * H], w[..., 3 * H:4 * H], w[..., 2 * H:3 * H]], axis=-1)


def init_params(key, input_size, hidden_size, output_size, num_layers):
    params = {"lstm": []}
    H = hidden_size
    k_lstm = 1.0 / jnp.sqrt(hidden_size)
    for layer in range(num_layers):
        in_sz = input_size if layer == 0 else hidden_size
        key, k1, k2, k3, k4 = jax.random.split(key, 5)
        w_ih = jax.random.uniform(k1, (4 * H, in_sz), jnp.float32, -k_lstm, k_lstm)
        w_hh = jax.random.uniform(k2, (4 * H, H), jnp.float32, -k_lstm, k_lstm)
        b_ih = jax.random.uniform(k3, (4 * H,), jnp.float32, -k_lstm, k_lstm)
        b_hh = jax.random.uniform(k4, (4 * H,), jnp.float32, -k_lstm, k_lstm)
        params["lstm"].append(
            {
                "wx_t": _reorder_gate_cols(w_ih.T, H),       # (in, 4H), columns [i,f,o,g]
                "wh_t": _reorder_gate_cols(w_hh.T, H),       # (H, 4H)
                "b": _reorder_gate_cols((b_ih + b_hh)[None, :], H),   # (1, 4H)
            }
        )

    def linear(key, fan_in, fan_out):
        k = 1.0 / jnp.sqrt(fan_in)
        kw, kb = jax.random.split(key)
        w = jax.random.uniform(kw, (fan_out, fan_in), jnp.float32, -k, k)
        b = jax.random.uniform(kb, (fan_out,), jnp.float32, -k, k)
        return {"w_t": w.T, "b": b[None, :]}

    key, kfc, kp2, kp3 = jax.random.split(key, 4)
    params["fc"] = linear(kfc, hidden_size, output_size)
    params["p2"] = linear(kp2, output_size, output_size)
    params["p3"] = linear(kp3, output_size, output_size)
    return params


if __name__ == "__main__":
    # Small shapes consistent with the module's forward.
    B, T = 2, 8
    input_size, hidden_size, output_size, num_layers = 8, 32, 4, 2

    key = jax.random.PRNGKey(0)
    key, kx, kp = jax.random.split(key, 3)
    x = jax.random.normal(kx, (B, T, input_size), jnp.float32)   # (batch, seq, feature)
    params = init_params(kp, input_size, hidden_size, output_size, num_layers)

    fwd = jax.jit(lstm_model_forward)
    out = fwd(x, params)
    jax.block_until_ready(out)

    assert out.shape == (B, output_size)
    print("KERNEL_OK")
</pallas_src>

<mosaic_0001>
module attributes {stable_mosaic.version = 11 : i64} {
  func.func @kernel(%arg0: i32, %arg1: memref<1x64x8xbf16, #tpu.memory_space<vmem>>, %arg2: memref<8x128xbf16, #tpu.memory_space<vmem>>, %arg3: memref<32x128xbf16, #tpu.memory_space<vmem>>, %arg4: memref<1x128xf32, #tpu.memory_space<vmem>>, %arg5: memref<32x128xbf16, #tpu.memory_space<vmem>>, %arg6: memref<32x128xbf16, #tpu.memory_space<vmem>>, %arg7: memref<1x128xf32, #tpu.memory_space<vmem>>, %arg8: memref<32x4xbf16, #tpu.memory_space<vmem>>, %arg9: memref<1x4xf32, #tpu.memory_space<vmem>>, %arg10: memref<4x4xbf16, #tpu.memory_space<vmem>>, %arg11: memref<1x4xf32, #tpu.memory_space<vmem>>, %arg12: memref<4x4xbf16, #tpu.memory_space<vmem>>, %arg13: memref<1x4xf32, #tpu.memory_space<vmem>>, %arg14: memref<8x4xf32, #tpu.memory_space<vmem>>, %arg15: memref<64x128xf32, #tpu.memory_space<vmem>>, %arg16: memref<64x32xbf16, #tpu.memory_space<vmem>>) attributes {dimension_semantics = [#tpu.dimension_semantics<parallel>], iteration_bounds = array<i64: 1>, scalar_prefetch = 0 : i64, scratch_operands = 2 : i64, tpu.core_type = #tpu.core_type<tc>, window_params = [{transform_indices = @transform_0, window_bounds = array<i64: 1, 64, 8>}, {pipeline_mode = #tpu.pipeline_mode<synchronous>, transform_indices = @transform_1, window_bounds = array<i64: 8, 128>}, {pipeline_mode = #tpu.pipeline_mode<synchronous>, transform_indices = @transform_2, window_bounds = array<i64: 32, 128>}, {pipeline_mode = #tpu.pipeline_mode<synchronous>, transform_indices = @transform_3, window_bounds = array<i64: 1, 128>}, {pipeline_mode = #tpu.pipeline_mode<synchronous>, transform_indices = @transform_4, window_bounds = array<i64: 32, 128>}, {pipeline_mode = #tpu.pipeline_mode<synchronous>, transform_indices = @transform_5, window_bounds = array<i64: 32, 128>}, {pipeline_mode = #tpu.pipeline_mode<synchronous>, transform_indices = @transform_6, window_bounds = array<i64: 1, 128>}, {pipeline_mode = #tpu.pipeline_mode<synchronous>, transform_indices = @transform_7, window_bounds = array<i64: 32, 4>}, {pipeline_mode = #tpu.pipeline_mode<synchronous>, transform_indices = @transform_8, window_bounds = array<i64: 1, 4>}, {pipeline_mode = #tpu.pipeline_mode<synchronous>, transform_indices = @transform_9, window_bounds = array<i64: 4, 4>}, {pipeline_mode = #tpu.pipeline_mode<synchronous>, transform_indices = @transform_10, window_bounds = array<i64: 1, 4>}, {pipeline_mode = #tpu.pipeline_mode<synchronous>, transform_indices = @transform_11, window_bounds = array<i64: 4, 4>}, {pipeline_mode = #tpu.pipeline_mode<synchronous>, transform_indices = @transform_12, window_bounds = array<i64: 1, 4>}, {transform_indices = @transform_13, window_bounds = array<i64: 8, 4>}]} {
    %c0 = arith.constant 0 : index
    %c0_0 = arith.constant 0 : index
    %c0_1 = arith.constant 0 : index
    %0 = vector.load %arg1[%c0, %c0_0, %c0_1] : memref<1x64x8xbf16, #tpu.memory_space<vmem>>, vector<1x64x8xbf16>
    %1 = vector.shape_cast %0 : vector<1x64x8xbf16> to vector<64x8xbf16>
    %c0_2 = arith.constant 0 : index
    %c0_3 = arith.constant 0 : index
    %2 = vector.load %arg2[%c0_2, %c0_3] : memref<8x128xbf16, #tpu.memory_space<vmem>>, vector<8x128xbf16>
    %cst = arith.constant dense<0.000000e+00> : vector<64x128xf32>
    %3 = tpu.matmul %1, %2, %cst {dimension_numbers = #tpu.dot_dimension_numbers<[1], [0], [0], [1], [0, 0, 1, 1], [], []>} : vector<64x8xbf16>, vector<8x128xbf16>, vector<64x128xf32> -> vector<64x128xf32>
    %c0_4 = arith.constant 0 : index
    %c0_5 = arith.constant 0 : index
    %4 = vector.load %arg4[%c0_4, %c0_5] : memref<1x128xf32, #tpu.memory_space<vmem>>, vector<1x128xf32>
    %5 = vector.broadcast %4 : vector<1x128xf32> to vector<64x128xf32>
    %6 = arith.addf %3, %5 : vector<64x128xf32>
    %c0_6 = arith.constant 0 : index
    %c0_7 = arith.constant 0 : index
    %7 = vector.load %arg15[%c0_6, %c0_7] : memref<64x128xf32, #tpu.memory_space<vmem>>, vector<64x128xf32>
    tpu.vector_store %arg15[%c0_6, %c0_7], %6 {strides = array<i32>} : memref<64x128xf32, #tpu.memory_space<vmem>>, vector<64x128xf32>,
    %cst_8 = arith.constant 0.000000e+00 : f32
    %8 = vector.broadcast %cst_8 : f32 to vector<8x32xf32>
    %cst_9 = arith.constant 0.000000e+00 : f32
    %9 = vector.broadcast %cst_9 : f32 to vector<8x32xf32>
    %c0_i32 = arith.constant 0 : i32
    %c8_i32 = arith.constant 8 : i32
    %10 = arith.muli %c0_i32, %c8_i32 : i32
    %11 = tpu.assume_multiple %10, 8 : i32
    %12 = arith.truncf %8 : vector<8x32xf32> to vector<8x32xbf16>
    %c0_10 = arith.constant 0 : index
    %c0_11 = arith.constant 0 : index
    %13 = vector.load %arg3[%c0_10, %c0_11] : memref<32x128xbf16, #tpu.memory_space<vmem>>, vector<32x128xbf16>
    %cst_12 = arith.constant dense<0.000000e+00> : vector<8x128xf32>
    %14 = tpu.matmul %12, %13, %cst_12 {dimension_numbers = #tpu.dot_dimension_numbers<[1], [0], [0], [1], [0, 0, 1, 1], [], []>} : vector<8x32xbf16>, vector<32x128xbf16>, vector<8x128xf32> -> vector<8x128xf32>
    %15 = arith.index_cast %11 : i32 to index
    %c0_13 = arith.constant 0 : index
    %16 = vector.load %arg15[%15, %c0_13] : memref<64x128xf32, #tpu.memory_space<vmem>>, vector<8x128xf32>
    %17 = arith.addf %14, %16 : vector<8x128xf32>
    %18 = vector.extract_strided_slice %17 {offsets = [0, 0], sizes = [8, 96], strides = [1, 1]} : vector<8x128xf32> to vector<8x96xf32>
    %19 = arith.negf %18 : vector<8x96xf32>
    %20 = math.exp %19 : vector<8x96xf32>
    %cst_14 = arith.constant 1.000000e+00 : f32
    %21 = vector.broadcast %cst_14 : f32 to vector<8x96xf32>
    %22 = arith.addf %21, %20 : vector<8x96xf32>
    %23 = arith.divf %21, %22 : vector<8x96xf32>
    %24 = vector.extract_strided_slice %23 {offsets = [0, 0], sizes = [8, 32], strides = [1, 1]} : vector<8x96xf32> to vector<8x32xf32>
    %25 = vector.extract_strided_slice %23 {offsets = [0, 32], sizes = [8, 32], strides = [1, 1]} : vector<8x96xf32> to vector<8x32xf32>
    %26 = vector.extract_strided_slice %23 {offsets = [0, 64], sizes = [8, 32], strides = [1, 1]} : vector<8x96xf32> to vector<8x32xf32>
    %27 = vector.extract_strided_slice %17 {offsets = [0, 96], sizes = [8, 32], strides = [1, 1]} : vector<8x128xf32> to vector<8x32xf32>
    %28 = math.tanh %27 : vector<8x32xf32>
    %29 = arith.mulf %25, %9 : vector<8x32xf32>
    %30 = arith.mulf %24, %28 : vector<8x32xf32>
    %31 = arith.addf %29, %30 : vector<8x32xf32>
    %32 = math.tanh %31 : vector<8x32xf32>
    %33 = arith.mulf %26, %32 : vector<8x32xf32>
    %34 = arith.truncf %33 : vector<8x32xf32> to vector<8x32xbf16>
    %35 = arith.index_cast %11 : i32 to index
    %c0_15 = arith.constant 0 : index
    %36 = vector.load %arg16[%35, %c0_15] : memref<64x32xbf16, #tpu.memory_space<vmem>>, vector<8x32xbf16>
    tpu.vector_store %arg16[%35, %c0_15], %34 {strides = array<i32>} : memref<64x32xbf16, #tpu.memory_space<vmem>>, vector<8x32xbf16>,
    %c1_i32 = arith.constant 1 : i32
    %c8_i32_16 = arith.constant 8 : i32
    %37 = arith.muli %c1_i32, %c8_i32_16 : i32
    %38 = tpu.assume_multiple %37, 8 : i32
    %39 = arith.truncf %33 : vector<8x32xf32> to vector<8x32xbf16>
    %c0_17 = arith.constant 0 : index
    %c0_18 = arith.constant 0 : index
    %40 = vector.load %arg3[%c0_17, %c0_18] : memref<32x128xbf16, #tpu.memory_space<vmem>>, vector<32x128xbf16>
    %cst_19 = arith.constant dense<0.000000e+00> : vector<8x128xf32>
    %41 = tpu.matmul %39, %40, %cst_19 {dimension_numbers = #tpu.dot_dimension_numbers<[1], [0], [0], [1], [0, 0, 1, 1], [], []>} : vector<8x32xbf16>, vector<32x128xbf16>, vector<8x128xf32> -> vector<8x128xf32>
    %42 = arith.index_cast %38 : i32 to index
    %c0_20 = arith.constant 0 : index
    %43 = vector.load %arg15[%42, %c0_20] : memref<64x128xf32, #tpu.memory_space<vmem>>, vector<8x128xf32>
    %44 = arith.addf %41, %43 : vector<8x128xf32>
    %45 = vector.extract_strided_slice %44 {offsets = [0, 0], sizes = [8, 96], strides = [1, 1]} : vector<8x128xf32> to vector<8x96xf32>
    %46 = arith.negf %45 : vector<8x96xf32>
    %47 = math.exp %46 : vector<8x96xf32>
    %cst_21 = arith.constant 1.000000e+00 : f32
    %48 = vector.broadcast %cst_21 : f32 to vector<8x96xf32>
    %49 = arith.addf %48, %47 : vector<8x96xf32>
    %50 = arith.divf %48, %49 : vector<8x96xf32>
    %51 = vector.extract_strided_slice %50 {offsets = [0, 0], sizes = [8, 32], strides = [1, 1]} : vector<8x96xf32> to vector<8x32xf32>
    %52 = vector.extract_strided_slice %50 {offsets = [0, 32], sizes = [8, 32], strides = [1, 1]} : vector<8x96xf32> to vector<8x32xf32>
    %53 = vector.extract_strided_slice %50 {offsets = [0, 64], sizes = [8, 32], strides = [1, 1]} : vector<8x96xf32> to vector<8x32xf32>
    %54 = vector.extract_strided_slice %44 {offsets = [0, 96], sizes = [8, 32], strides = [1, 1]} : vector<8x128xf32> to vector<8x32xf32>
    %55 = math.tanh %54 : vector<8x32xf32>
    %56 = arith.mulf %52, %31 : vector<8x32xf32>
    %57 = arith.mulf %51, %55 : vector<8x32xf32>
    %58 = arith.addf %56, %57 : vector<8x32xf32>
    %59 = math.tanh %58 : vector<8x32xf32>
    %60 = arith.mulf %53, %59 : vector<8x32xf32>
    %61 = arith.truncf %60 : vector<8x32xf32> to vector<8x32xbf16>
    %62 = arith.index_cast %38 : i32 to index
    %c0_22 = arith.constant 0 : index
    %63 = vector.load %arg16[%62, %c0_22] : memref<64x32xbf16, #tpu.memory_space<vmem>>, vector<8x32xbf16>
    tpu.vector_store %arg16[%62, %c0_22], %61 {strides = array<i32>} : memref<64x32xbf16, #tpu.memory_space<vmem>>, vector<8x32xbf16>,
    %c2_i32 = arith.constant 2 : i32
    %c8_i32_23 = arith.constant 8 : i32
    %64 = arith.muli %c2_i32, %c8_i32_23 : i32
    %65 = tpu.assume_multiple %64, 8 : i32
    %66 = arith.truncf %60 : vector<8x32xf32> to vector<8x32xbf16>
    %c0_24 = arith.constant 0 : index
    %c0_25 = arith.constant 0 : index
    %67 = vector.load %arg3[%c0_24, %c0_25] : memref<32x128xbf16, #tpu.memory_space<vmem>>, vector<32x128xbf16>
    %cst_26 = arith.constant dense<0.000000e+00> : vector<8x128xf32>
    %68 = tpu.matmul %66, %67, %cst_26 {dimension_numbers = #tpu.dot_dimension_numbers<[1], [0], [0], [1], [0, 0, 1, 1], [], []>} : vector<8x32xbf16>, vector<32x128xbf16>, vector<8x128xf32> -> vector<8x128xf32>
    %69 = arith.index_cast %65 : i32 to index
    %c0_27 = arith.constant 0 : index
    %70 = vector.load %arg15[%69, %c0_27] : memref<64x128xf32, #tpu.memory_space<vmem>>, vector<8x128xf32>
    %71 = arith.addf %68, %70 : vector<8x128xf32>
    %72 = vector.extract_strided_slice %71 {offsets = [0, 0], sizes = [8, 96], strides = [1, 1]} : vector<8x128xf32> to vector<8x96xf32>
    %73 = arith.negf %72 : vector<8x96xf32>
    %74 = math.exp %73 : vector<8x96xf32>
    %cst_28 = arith.constant 1.000000e+00 : f32
    %75 = vector.broadcast %cst_28 : f32 to vector<8x96xf32>
    %76 = arith.addf %75, %74 : vector<8x96xf32>
    %77 = arith.divf %75, %76 : vector<8x96xf32>
    %78 = vector.extract_strided_slice %77 {offsets = [0, 0], sizes = [8, 32], strides = [1, 1]} : vector<8x96xf32> to vector<8x32xf32>
    %79 = vector.extract_strided_slice %77 {offsets = [0, 32], sizes = [8, 32], strides = [1, 1]} : vector<8x96xf32> to vector<8x32xf32>
    %80 = vector.extract_strided_slice %77 {offsets = [0, 64], sizes = [8, 32], strides = [1, 1]} : vector<8x96xf32> to vector<8x32xf32>
    %81 = vector.extract_strided_slice %71 {offsets = [0, 96], sizes = [8, 32], strides = [1, 1]} : vector<8x128xf32> to vector<8x32xf32>
    %82 = math.tanh %81 : vector<8x32xf32>
    %83 = arith.mulf %79, %58 : vector<8x32xf32>
    %84 = arith.mulf %78, %82 : vector<8x32xf32>
    %85 = arith.addf %83, %84 : vector<8x32xf32>
    %86 = math.tanh %85 : vector<8x32xf32>
    %87 = arith.mulf %80, %86 : vector<8x32xf32>
    %88 = arith.truncf %87 : vector<8x32xf32> to vector<8x32xbf16>
    %89 = arith.index_cast %65 : i32 to index
    %c0_29 = arith.constant 0 : index
    %90 = vector.load %arg16[%89, %c0_29] : memref<64x32xbf16, #tpu.memory_space<vmem>>, vector<8x32xbf16>
    tpu.vector_store %arg16[%89, %c0_29], %88 {strides = array<i32>} : memref<64x32xbf16, #tpu.memory_space<vmem>>, vector<8x32xbf16>,
    %c3_i32 = arith.constant 3 : i32
    %c8_i32_30 = arith.constant 8 : i32
    %91 = arith.muli %c3_i32, %c8_i32_30 : i32
    %92 = tpu.assume_multiple %91, 8 : i32
    %93 = arith.truncf %87 : vector<8x32xf32> to vector<8x32xbf16>
    %c0_31 = arith.constant 0 : index
    %c0_32 = arith.constant 0 : index
    %94 = vector.load %arg3[%c0_31, %c0_32] : memref<32x128xbf16, #tpu.memory_space<vmem>>, vector<32x128xbf16>
    %cst_33 = arith.constant dense<0.000000e+00> : vector<8x128xf32>
    %95 = tpu.matmul %93, %94, %cst_33 {dimension_numbers = #tpu.dot_dimension_numbers<[1], [0], [0], [1], [0, 0, 1, 1], [], []>} : vector<8x32xbf16>, vector<32x128xbf16>, vector<8x128xf32> -> vector<8x128xf32>
    %96 = arith.index_cast %92 : i32 to index
    %c0_34 = arith.constant 0 : index
    %97 = vector.load %arg15[%96, %c0_34] : memref<64x128xf32, #tpu.memory_space<vmem>>, vector<8x128xf32>
    %98 = arith.addf %95, %97 : vector<8x128xf32>
    %99 = vector.extract_strided_slice %98 {offsets = [0, 0], sizes = [8, 96], strides = [1, 1]} : vector<8x128xf32> to vector<8x96xf32>
    %100 = arith.negf %99 : vector<8x96xf32>
    %101 = math.exp %100 : vector<8x96xf32>
    %cst_35 = arith.constant 1.000000e+00 : f32
    %102 = vector.broadcast %cst_35 : f32 to vector<8x96xf32>
    %103 = arith.addf %102, %101 : vector<8x96xf32>
    %104 = arith.divf %102, %103 : vector<8x96xf32>
    %105 = vector.extract_strided_slice %104 {offsets = [0, 0], sizes = [8, 32], strides = [1, 1]} : vector<8x96xf32> to vector<8x32xf32>
    %106 = vector.extract_strided_slice %104 {offsets = [0, 32], sizes = [8, 32], strides = [1, 1]} : vector<8x96xf32> to vector<8x32xf32>
    %107 = vector.extract_strided_slice %104 {offsets = [0, 64], sizes = [8, 32], strides = [1, 1]} : vector<8x96xf32> to vector<8x32xf32>
    %108 = vector.extract_strided_slice %98 {offsets = [0, 96], sizes = [8, 32], strides = [1, 1]} : vector<8x128xf32> to vector<8x32xf32>
    %109 = math.tanh %108 : vector<8x32xf32>
    %110 = arith.mulf %106, %85 : vector<8x32xf32>
    %111 = arith.mulf %105, %109 : vector<8x32xf32>
    %112 = arith.addf %110, %111 : vector<8x32xf32>
    %113 = math.tanh %112 : vector<8x32xf32>
    %114 = arith.mulf %107, %113 : vector<8x32xf32>
    %115 = arith.truncf %114 : vector<8x32xf32> to vector<8x32xbf16>
    %116 = arith.index_cast %92 : i32 to index
    %c0_36 = arith.constant 0 : index
    %117 = vector.load %arg16[%116, %c0_36] : memref<64x32xbf16, #tpu.memory_space<vmem>>, vector<8x32xbf16>
    tpu.vector_store %arg16[%116, %c0_36], %115 {strides = array<i32>} : memref<64x32xbf16, #tpu.memory_space<vmem>>, vector<8x32xbf16>,
    %c4_i32 = arith.constant 4 : i32
    %c8_i32_37 = arith.constant 8 : i32
    %118 = arith.muli %c4_i32, %c8_i32_37 : i32
    %119 = tpu.assume_multiple %118, 8 : i32
    %120 = arith.truncf %114 : vector<8x32xf32> to vector<8x32xbf16>
    %c0_38 = arith.constant 0 : index
    %c0_39 = arith.constant 0 : index
    %121 = vector.load %arg3[%c0_38, %c0_39] : memref<32x128xbf16, #tpu.memory_space<vmem>>, vector<32x128xbf16>
    %cst_40 = arith.constant dense<0.000000e+00> : vector<8x128xf32>
    %122 = tpu.matmul %120, %121, %cst_40 {dimension_numbers = #tpu.dot_dimension_numbers<[1], [0], [0], [1], [0, 0, 1, 1], [], []>} : vector<8x32xbf16>, vector<32x128xbf16>, vector<8x128xf32> -> vector<8x128xf32>
    %123 = arith.index_cast %119 : i32 to index
    %c0_41 = arith.constant 0 : index
    %124 = vector.load %arg15[%123, %c0_41] : memref<64x128xf32, #tpu.memory_space<vmem>>, vector<8x128xf32>
    %125 = arith.addf %122, %124 : vector<8x128xf32>
    %126 = vector.extract_strided_slice %125 {offsets = [0, 0], sizes = [8, 96], strides = [1, 1]} : vector<8x128xf32> to vector<8x96xf32>
    %127 = arith.negf %126 : vector<8x96xf32>
    %128 = math.exp %127 : vector<8x96xf32>
    %cst_42 = arith.constant 1.000000e+00 : f32
    %129 = vector.broadcast %cst_42 : f32 to vector<8x96xf32>
    %130 = arith.addf %129, %128 : vector<8x96xf32>
    %131 = arith.divf %129, %130 : vector<8x96xf32>
    %132 = vector.extract_strided_slice %131 {offsets = [0, 0], sizes = [8, 32], strides = [1, 1]} : vector<8x96xf32> to vector<8x32xf32>
    %133 = vector.extract_strided_slice %131 {offsets = [0, 32], sizes = [8, 32], strides = [1, 1]} : vector<8x96xf32> to vector<8x32xf32>
    %134 = vector.extract_strided_slice %131 {offsets = [0, 64], sizes = [8, 32], strides = [1, 1]} : vector<8x96xf32> to vector<8x32xf32>
    %135 = vector.extract_strided_slice %125 {offsets = [0, 96], sizes = [8, 32], strides = [1, 1]} : vector<8x128xf32> to vector<8x32xf32>
    %136 = math.tanh %135 : vector<8x32xf32>
    %137 = arith.mulf %133, %112 : vector<8x32xf32>
    %138 = arith.mulf %132, %136 : vector<8x32xf32>
    %139 = arith.addf %137, %138 : vector<8x32xf32>
    %140 = math.tanh %139 : vector<8x32xf32>
    %141 = arith.mulf %134, %140 : vector<8x32xf32>
    %142 = arith.truncf %141 : vector<8x32xf32> to vector<8x32xbf16>
    %143 = arith.index_cast %119 : i32 to index
    %c0_43 = arith.constant 0 : index
    %144 = vector.load %arg16[%143, %c0_43] : memref<64x32xbf16, #tpu.memory_space<vmem>>, vector<8x32xbf16>
    tpu.vector_store %arg16[%143, %c0_43], %142 {strides = array<i32>} : memref<64x32xbf16, #tpu.memory_space<vmem>>, vector<8x32xbf16>,
    %c5_i32 = arith.constant 5 : i32
    %c8_i32_44 = arith.constant 8 : i32
    %145 = arith.muli %c5_i32, %c8_i32_44 : i32
    %146 = tpu.assume_multiple %145, 8 : i32
    %147 = arith.truncf %141 : vector<8x32xf32> to vector<8x32xbf16>
    %c0_45 = arith.constant 0 : index
    %c0_46 = arith.constant 0 : index
    %148 = vector.load %arg3[%c0_45, %c0_46] : memref<32x128xbf16, #tpu.memory_space<vmem>>, vector<32x128xbf16>
    %cst_47 = arith.constant dense<0.000000e+00> : vector<8x128xf32>
    %149 = tpu.matmul %147, %148, %cst_47 {dimension_numbers = #tpu.dot_dimension_numbers<[1], [0], [0], [1], [0, 0, 1, 1], [], []>} : vector<8x32xbf16>, vector<32x128xbf16>, vector<8x128xf32> -> vector<8x128xf32>
    %150 = arith.index_cast %146 : i32 to index
    %c0_48 = arith.constant 0 : index
    %151 = vector.load %arg15[%150, %c0_48] : memref<64x128xf32, #tpu.memory_space<vmem>>, vector<8x128xf32>
    %152 = arith.addf %149, %151 : vector<8x128xf32>
    %153 = vector.extract_strided_slice %152 {offsets = [0, 0], sizes = [8, 96], strides = [1, 1]} : vector<8x128xf32> to vector<8x96xf32>
    %154 = arith.negf %153 : vector<8x96xf32>
    %155 = math.exp %154 : vector<8x96xf32>
    %cst_49 = arith.constant 1.000000e+00 : f32
    %156 = vector.broadcast %cst_49 : f32 to vector<8x96xf32>
    %157 = arith.addf %156, %155 : vector<8x96xf32>
    %158 = arith.divf %156, %157 : vector<8x96xf32>
    %159 = vector.extract_strided_slice %158 {offsets = [0, 0], sizes = [8, 32], strides = [1, 1]} : vector<8x96xf32> to vector<8x32xf32>
    %160 = vector.extract_strided_slice %158 {offsets = [0, 32], sizes = [8, 32], strides = [1, 1]} : vector<8x96xf32> to vector<8x32xf32>
    %161 = vector.extract_strided_slice %158 {offsets = [0, 64], sizes = [8, 32], strides = [1, 1]} : vector<8x96xf32> to vector<8x32xf32>
    %162 = vector.extract_strided_slice %152 {offsets = [0, 96], sizes = [8, 32], strides = [1, 1]} : vector<8x128xf32> to vector<8x32xf32>
    %163 = math.tanh %162 : vector<8x32xf32>
    %164 = arith.mulf %160, %139 : vector<8x32xf32>
    %165 = arith.mulf %159, %163 : vector<8x32xf32>
    %166 = arith.addf %164, %165 : vector<8x32xf32>
    %167 = math.tanh %166 : vector<8x32xf32>
    %168 = arith.mulf %161, %167 : vector<8x32xf32>
    %169 = arith.truncf %168 : vector<8x32xf32> to vector<8x32xbf16>
    %170 = arith.index_cast %146 : i32 to index
    %c0_50 = arith.constant 0 : index
    %171 = vector.load %arg16[%170, %c0_50] : memref<64x32xbf16, #tpu.memory_space<vmem>>, vector<8x32xbf16>
    tpu.vector_store %arg16[%170, %c0_50], %169 {strides = array<i32>} : memref<64x32xbf16, #tpu.memory_space<vmem>>, vector<8x32xbf16>,
    %c6_i32 = arith.constant 6 : i32
    %c8_i32_51 = arith.constant 8 : i32
    %172 = arith.muli %c6_i32, %c8_i32_51 : i32
    %173 = tpu.assume_multiple %172, 8 : i32
    %174 = arith.truncf %168 : vector<8x32xf32> to vector<8x32xbf16>
    %c0_52 = arith.constant 0 : index
    %c0_53 = arith.constant 0 : index
    %175 = vector.load %arg3[%c0_52, %c0_53] : memref<32x128xbf16, #tpu.memory_space<vmem>>, vector<32x128xbf16>
    %cst_54 = arith.constant dense<0.000000e+00> : vector<8x128xf32>
    %176 = tpu.matmul %174, %175, %cst_54 {dimension_numbers = #tpu.dot_dimension_numbers<[1], [0], [0], [1], [0, 0, 1, 1], [], []>} : vector<8x32xbf16>, vector<32x128xbf16>, vector<8x128xf32> -> vector<8x128xf32>
    %177 = arith.index_cast %173 : i32 to index
    %c0_55 = arith.constant 0 : index
    %178 = vector.load %arg15[%177, %c0_55] : memref<64x128xf32, #tpu.memory_space<vmem>>, vector<8x128xf32>
    %179 = arith.addf %176, %178 : vector<8x128xf32>
    %180 = vector.extract_strided_slice %179 {offsets = [0, 0], sizes = [8, 96], strides = [1, 1]} : vector<8x128xf32> to vector<8x96xf32>
    %181 = arith.negf %180 : vector<8x96xf32>
    %182 = math.exp %181 : vector<8x96xf32>
    %cst_56 = arith.constant 1.000000e+00 : f32
    %183 = vector.broadcast %cst_56 : f32 to vector<8x96xf32>
    %184 = arith.addf %183, %182 : vector<8x96xf32>
    %185 = arith.divf %183, %184 : vector<8x96xf32>
    %186 = vector.extract_strided_slice %185 {offsets = [0, 0], sizes = [8, 32], strides = [1, 1]} : vector<8x96xf32> to vector<8x32xf32>
    %187 = vector.extract_strided_slice %185 {offsets = [0, 32], sizes = [8, 32], strides = [1, 1]} : vector<8x96xf32> to vector<8x32xf32>
    %188 = vector.extract_strided_slice %185 {offsets = [0, 64], sizes = [8, 32], strides = [1, 1]} : vector<8x96xf32> to vector<8x32xf32>
    %189 = vector.extract_strided_slice %179 {offsets = [0, 96], sizes = [8, 32], strides = [1, 1]} : vector<8x128xf32> to vector<8x32xf32>
    %190 = math.tanh %189 : vector<8x32xf32>
    %191 = arith.mulf %187, %166 : vector<8x32xf32>
    %192 = arith.mulf %186, %190 : vector<8x32xf32>
    %193 = arith.addf %191, %192 : vector<8x32xf32>
    %194 = math.tanh %193 : vector<8x32xf32>
    %195 = arith.mulf %188, %194 : vector<8x32xf32>
    %196 = arith.truncf %195 : vector<8x32xf32> to vector<8x32xbf16>
    %197 = arith.index_cast %173 : i32 to index
    %c0_57 = arith.constant 0 : index
    %198 = vector.load %arg16[%197, %c0_57] : memref<64x32xbf16, #tpu.memory_space<vmem>>, vector<8x32xbf16>
    tpu.vector_store %arg16[%197, %c0_57], %196 {strides = array<i32>} : memref<64x32xbf16, #tpu.memory_space<vmem>>, vector<8x32xbf16>,
    %c7_i32 = arith.constant 7 : i32
    %c8_i32_58 = arith.constant 8 : i32
    %199 = arith.muli %c7_i32, %c8_i32_58 : i32
    %200 = tpu.assume_multiple %199, 8 : i32
    %201 = arith.truncf %195 : vector<8x32xf32> to vector<8x32xbf16>
    %c0_59 = arith.constant 0 : index
    %c0_60 = arith.constant 0 : index
    %202 = vector.load %arg3[%c0_59, %c0_60] : memref<32x128xbf16, #tpu.memory_space<vmem>>, vector<32x128xbf16>
    %cst_61 = arith.constant dense<0.000000e+00> : vector<8x128xf32>
    %203 = tpu.matmul %201, %202, %cst_61 {dimension_numbers = #tpu.dot_dimension_numbers<[1], [0], [0], [1], [0, 0, 1, 1], [], []>} : vector<8x32xbf16>, vector<32x128xbf16>, vector<8x128xf32> -> vector<8x128xf32>
    %204 = arith.index_cast %200 : i32 to index
    %c0_62 = arith.constant 0 : index
    %205 = vector.load %arg15[%204, %c0_62] : memref<64x128xf32, #tpu.memory_space<vmem>>, vector<8x128xf32>
    %206 = arith.addf %203, %205 : vector<8x128xf32>
    %207 = vector.extract_strided_slice %206 {offsets = [0, 0], sizes = [8, 96], strides = [1, 1]} : vector<8x128xf32> to vector<8x96xf32>
    %208 = arith.negf %207 : vector<8x96xf32>
    %209 = math.exp %208 : vector<8x96xf32>
    %cst_63 = arith.constant 1.000000e+00 : f32
    %210 = vector.broadcast %cst_63 : f32 to vector<8x96xf32>
    %211 = arith.addf %210, %209 : vector<8x96xf32>
    %212 = arith.divf %210, %211 : vector<8x96xf32>
    %213 = vector.extract_strided_slice %212 {offsets = [0, 0], sizes = [8, 32], strides = [1, 1]} : vector<8x96xf32> to vector<8x32xf32>
    %214 = vector.extract_strided_slice %212 {offsets = [0, 32], sizes = [8, 32], strides = [1, 1]} : vector<8x96xf32> to vector<8x32xf32>
    %215 = vector.extract_strided_slice %212 {offsets = [0, 64], sizes = [8, 32], strides = [1, 1]} : vector<8x96xf32> to vector<8x32xf32>
    %216 = vector.extract_strided_slice %206 {offsets = [0, 96], sizes = [8, 32], strides = [1, 1]} : vector<8x128xf32> to vector<8x32xf32>
    %217 = math.tanh %216 : vector<8x32xf32>
    %218 = arith.mulf %214, %193 : vector<8x32xf32>
    %219 = arith.mulf %213, %217 : vector<8x32xf32>
    %220 = arith.addf %218, %219 : vector<8x32xf32>
    %221 = math.tanh %220 : vector<8x32xf32>
    %222 = arith.mulf %215, %221 : vector<8x32xf32>
    %223 = arith.truncf %222 : vector<8x32xf32> to vector<8x32xbf16>
    %224 = arith.index_cast %200 : i32 to index
    %c0_64 = arith.constant 0 : index
    %225 = vector.load %arg16[%224, %c0_64] : memref<64x32xbf16, #tpu.memory_space<vmem>>, vector<8x32xbf16>
    tpu.vector_store %arg16[%224, %c0_64], %223 {strides = array<i32>} : memref<64x32xbf16, #tpu.memory_space<vmem>>, vector<8x32xbf16>,
    %c8_i32_65 = arith.constant 8 : i32
    %c0_66 = arith.constant 0 : index
    %c0_67 = arith.constant 0 : index
    %226 = vector.load %arg16[%c0_66, %c0_67] : memref<64x32xbf16, #tpu.memory_space<vmem>>, vector<64x32xbf16>
    %c0_68 = arith.constant 0 : index
    %c0_69 = arith.constant 0 : index
    %227 = vector.load %arg5[%c0_68, %c0_69] : memref<32x128xbf16, #tpu.memory_space<vmem>>, vector<32x128xbf16>
    %cst_70 = arith.constant dense<0.000000e+00> : vector<64x128xf32>
    %228 = tpu.matmul %226, %227, %cst_70 {dimension_numbers = #tpu.dot_dimension_numbers<[1], [0], [0], [1], [0, 0, 1, 1], [], []>} : vector<64x32xbf16>, vector<32x128xbf16>, vector<64x128xf32> -> vector<64x128xf32>
    %c0_71 = arith.constant 0 : index
    %c0_72 = arith.constant 0 : index
    %229 = vector.load %arg7[%c0_71, %c0_72] : memref<1x128xf32, #tpu.memory_space<vmem>>, vector<1x128xf32>
    %230 = vector.broadcast %229 : vector<1x128xf32> to vector<64x128xf32>
    %231 = arith.addf %228, %230 : vector<64x128xf32>
    %c0_73 = arith.constant 0 : index
    %c0_74 = arith.constant 0 : index
    %232 = vector.load %arg15[%c0_73, %c0_74] : memref<64x128xf32, #tpu.memory_space<vmem>>, vector<64x128xf32>
    tpu.vector_store %arg15[%c0_73, %c0_74], %231 {strides = array<i32>} : memref<64x128xf32, #tpu.memory_space<vmem>>, vector<64x128xf32>,
    %cst_75 = arith.constant 0.000000e+00 : f32
    %233 = vector.broadcast %cst_75 : f32 to vector<8x32xf32>
    %cst_76 = arith.constant 0.000000e+00 : f32
    %234 = vector.broadcast %cst_76 : f32 to vector<8x32xf32>
    %c0_i32_77 = arith.constant 0 : i32
    %c8_i32_78 = arith.constant 8 : i32
    %235 = arith.muli %c0_i32_77, %c8_i32_78 : i32
    %236 = tpu.assume_multiple %235, 8 : i32
    %237 = arith.truncf %233 : vector<8x32xf32> to vector<8x32xbf16>
    %c0_79 = arith.constant 0 : index
    %c0_80 = arith.constant 0 : index
    %238 = vector.load %arg6[%c0_79, %c0_80] : memref<32x128xbf16, #tpu.memory_space<vmem>>, vector<32x128xbf16>
    %cst_81 = arith.constant dense<0.000000e+00> : vector<8x128xf32>
    %239 = tpu.matmul %237, %238, %cst_81 {dimension_numbers = #tpu.dot_dimension_numbers<[1], [0], [0], [1], [0, 0, 1, 1], [], []>} : vector<8x32xbf16>, vector<32x128xbf16>, vector<8x128xf32> -> vector<8x128xf32>
    %240 = arith.index_cast %236 : i32 to index
    %c0_82 = arith.constant 0 : index
    %241 = vector.load %arg15[%240, %c0_82] : memref<64x128xf32, #tpu.memory_space<vmem>>, vector<8x128xf32>
    %242 = arith.addf %239, %241 : vector<8x128xf32>
    %243 = vector.extract_strided_slice %242 {offsets = [0, 0], sizes = [8, 96], strides = [1, 1]} : vector<8x128xf32> to vector<8x96xf32>
    %244 = arith.negf %243 : vector<8x96xf32>
    %245 = math.exp %244 : vector<8x96xf32>
    %cst_83 = arith.constant 1.000000e+00 : f32
    %246 = vector.broadcast %cst_83 : f32 to vector<8x96xf32>
    %247 = arith.addf %246, %245 : vector<8x96xf32>
    %248 = arith.divf %246, %247 : vector<8x96xf32>
    %249 = vector.extract_strided_slice %248 {offsets = [0, 0], sizes = [8, 32], strides = [1, 1]} : vector<8x96xf32> to vector<8x32xf32>
    %250 = vector.extract_strided_slice %248 {offsets = [0, 32], sizes = [8, 32], strides = [1, 1]} : vector<8x96xf32> to vector<8x32xf32>
    %251 = vector.extract_strided_slice %248 {offsets = [0, 64], sizes = [8, 32], strides = [1, 1]} : vector<8x96xf32> to vector<8x32xf32>
    %252 = vector.extract_strided_slice %242 {offsets = [0, 96], sizes = [8, 32], strides = [1, 1]} : vector<8x128xf32> to vector<8x32xf32>
    %253 = math.tanh %252 : vector<8x32xf32>
    %254 = arith.mulf %250, %234 : vector<8x32xf32>
    %255 = arith.mulf %249, %253 : vector<8x32xf32>
    %256 = arith.addf %254, %255 : vector<8x32xf32>
    %257 = math.tanh %256 : vector<8x32xf32>
    %258 = arith.mulf %251, %257 : vector<8x32xf32>
    %c1_i32_84 = arith.constant 1 : i32
    %c8_i32_85 = arith.constant 8 : i32
    %259 = arith.muli %c1_i32_84, %c8_i32_85 : i32
    %260 = tpu.assume_multiple %259, 8 : i32
    %261 = arith.truncf %258 : vector<8x32xf32> to vector<8x32xbf16>
    %c0_86 = arith.constant 0 : index
    %c0_87 = arith.constant 0 : index
    %262 = vector.load %arg6[%c0_86, %c0_87] : memref<32x128xbf16, #tpu.memory_space<vmem>>, vector<32x128xbf16>
    %cst_88 = arith.constant dense<0.000000e+00> : vector<8x128xf32>
    %263 = tpu.matmul %261, %262, %cst_88 {dimension_numbers = #tpu.dot_dimension_numbers<[1], [0], [0], [1], [0, 0, 1, 1], [], []>} : vector<8x32xbf16>, vector<32x128xbf16>, vector<8x128xf32> -> vector<8x128xf32>
    %264 = arith.index_cast %260 : i32 to index
    %c0_89 = arith.constant 0 : index
    %265 = vector.load %arg15[%264, %c0_89] : memref<64x128xf32, #tpu.memory_space<vmem>>, vector<8x128xf32>
    %266 = arith.addf %263, %265 : vector<8x128xf32>
    %267 = vector.extract_strided_slice %266 {offsets = [0, 0], sizes = [8, 96], strides = [1, 1]} : vector<8x128xf32> to vector<8x96xf32>
    %268 = arith.negf %267 : vector<8x96xf32>
    %269 = math.exp %268 : vector<8x96xf32>
    %cst_90 = arith.constant 1.000000e+00 : f32
    %270 = vector.broadcast %cst_90 : f32 to vector<8x96xf32>
    %271 = arith.addf %270, %269 : vector<8x96xf32>
    %272 = arith.divf %270, %271 : vector<8x96xf32>
    %273 = vector.extract_strided_slice %272 {offsets = [0, 0], sizes = [8, 32], strides = [1, 1]} : vector<8x96xf32> to vector<8x32xf32>
    %274 = vector.extract_strided_slice %272 {offsets = [0, 32], sizes = [8, 32], strides = [1, 1]} : vector<8x96xf32> to vector<8x32xf32>
    %275 = vector.extract_strided_slice %272 {offsets = [0, 64], sizes = [8, 32], strides = [1, 1]} : vector<8x96xf32> to vector<8x32xf32>
    %276 = vector.extract_strided_slice %266 {offsets = [0, 96], sizes = [8, 32], strides = [1, 1]} : vector<8x128xf32> to vector<8x32xf32>
    %277 = math.tanh %276 : vector<8x32xf32>
    %278 = arith.mulf %274, %256 : vector<8x32xf32>
    %279 = arith.mulf %273, %277 : vector<8x32xf32>
    %280 = arith.addf %278, %279 : vector<8x32xf32>
    %281 = math.tanh %280 : vector<8x32xf32>
    %282 = arith.mulf %275, %281 : vector<8x32xf32>
    %c2_i32_91 = arith.constant 2 : i32
    %c8_i32_92 = arith.constant 8 : i32
    %283 = arith.muli %c2_i32_91, %c8_i32_92 : i32
    %284 = tpu.assume_multiple %283, 8 : i32
    %285 = arith.truncf %282 : vector<8x32xf32> to vector<8x32xbf16>
    %c0_93 = arith.constant 0 : index
    %c0_94 = arith.constant 0 : index
    %286 = vector.load %arg6[%c0_93, %c0_94] : memref<32x128xbf16, #tpu.memory_space<vmem>>, vector<32x128xbf16>
    %cst_95 = arith.constant dense<0.000000e+00> : vector<8x128xf32>
    %287 = tpu.matmul %285, %286, %cst_95 {dimension_numbers = #tpu.dot_dimension_numbers<[1], [0], [0], [1], [0, 0, 1, 1], [], []>} : vector<8x32xbf16>, vector<32x128xbf16>, vector<8x128xf32> -> vector<8x128xf32>
    %288 = arith.index_cast %284 : i32 to index
    %c0_96 = arith.constant 0 : index
    %289 = vector.load %arg15[%288, %c0_96] : memref<64x128xf32, #tpu.memory_space<vmem>>, vector<8x128xf32>
    %290 = arith.addf %287, %289 : vector<8x128xf32>
    %291 = vector.extract_strided_slice %290 {offsets = [0, 0], sizes = [8, 96], strides = [1, 1]} : vector<8x128xf32> to vector<8x96xf32>
    %292 = arith.negf %291 : vector<8x96xf32>
    %293 = math.exp %292 : vector<8x96xf32>
    %cst_97 = arith.constant 1.000000e+00 : f32
    %294 = vector.broadcast %cst_97 : f32 to vector<8x96xf32>
    %295 = arith.addf %294, %293 : vector<8x96xf32>
    %296 = arith.divf %294, %295 : vector<8x96xf32>
    %297 = vector.extract_strided_slice %296 {offsets = [0, 0], sizes = [8, 32], strides = [1, 1]} : vector<8x96xf32> to vector<8x32xf32>
    %298 = vector.extract_strided_slice %296 {offsets = [0, 32], sizes = [8, 32], strides = [1, 1]} : vector<8x96xf32> to vector<8x32xf32>
    %299 = vector.extract_strided_slice %296 {offsets = [0, 64], sizes = [8, 32], strides = [1, 1]} : vector<8x96xf32> to vector<8x32xf32>
    %300 = vector.extract_strided_slice %290 {offsets = [0, 96], sizes = [8, 32], strides = [1, 1]} : vector<8x128xf32> to vector<8x32xf32>
    %301 = math.tanh %300 : vector<8x32xf32>
    %302 = arith.mulf %298, %280 : vector<8x32xf32>
    %303 = arith.mulf %297, %301 : vector<8x32xf32>
    %304 = arith.addf %302, %303 : vector<8x32xf32>
    %305 = math.tanh %304 : vector<8x32xf32>
    %306 = arith.mulf %299, %305 : vector<8x32xf32>
    %c3_i32_98 = arith.constant 3 : i32
    %c8_i32_99 = arith.constant 8 : i32
    %307 = arith.muli %c3_i32_98, %c8_i32_99 : i32
    %308 = tpu.assume_multiple %307, 8 : i32
    %309 = arith.truncf %306 : vector<8x32xf32> to vector<8x32xbf16>
    %c0_100 = arith.constant 0 : index
    %c0_101 = arith.constant 0 : index
    %310 = vector.load %arg6[%c0_100, %c0_101] : memref<32x128xbf16, #tpu.memory_space<vmem>>, vector<32x128xbf16>
    %cst_102 = arith.constant dense<0.000000e+00> : vector<8x128xf32>
    %311 = tpu.matmul %309, %310, %cst_102 {dimension_numbers = #tpu.dot_dimension_numbers<[1], [0], [0], [1], [0, 0, 1, 1], [], []>} : vector<8x32xbf16>, vector<32x128xbf16>, vector<8x128xf32> -> vector<8x128xf32>
    %312 = arith.index_cast %308 : i32 to index
    %c0_103 = arith.constant 0 : index
    %313 = vector.load %arg15[%312, %c0_103] : memref<64x128xf32, #tpu.memory_space<vmem>>, vector<8x128xf32>
    %314 = arith.addf %311, %313 : vector<8x128xf32>
    %315 = vector.extract_strided_slice %314 {offsets = [0, 0], sizes = [8, 96], strides = [1, 1]} : vector<8x128xf32> to vector<8x96xf32>
    %316 = arith.negf %315 : vector<8x96xf32>
    %317 = math.exp %316 : vector<8x96xf32>
    %cst_104 = arith.constant 1.000000e+00 : f32
    %318 = vector.broadcast %cst_104 : f32 to vector<8x96xf32>
    %319 = arith.addf %318, %317 : vector<8x96xf32>
    %320 = arith.divf %318, %319 : vector<8x96xf32>
    %321 = vector.extract_strided_slice %320 {offsets = [0, 0], sizes = [8, 32], strides = [1, 1]} : vector<8x96xf32> to vector<8x32xf32>
    %322 = vector.extract_strided_slice %320 {offsets = [0, 32], sizes = [8, 32], strides = [1, 1]} : vector<8x96xf32> to vector<8x32xf32>
    %323 = vector.extract_strided_slice %320 {offsets = [0, 64], sizes = [8, 32], strides = [1, 1]} : vector<8x96xf32> to vector<8x32xf32>
    %324 = vector.extract_strided_slice %314 {offsets = [0, 96], sizes = [8, 32], strides = [1, 1]} : vector<8x128xf32> to vector<8x32xf32>
    %325 = math.tanh %324 : vector<8x32xf32>
    %326 = arith.mulf %322, %304 : vector<8x32xf32>
    %327 = arith.mulf %321, %325 : vector<8x32xf32>
    %328 = arith.addf %326, %327 : vector<8x32xf32>
    %329 = math.tanh %328 : vector<8x32xf32>
    %330 = arith.mulf %323, %329 : vector<8x32xf32>
    %c4_i32_105 = arith.constant 4 : i32
    %c8_i32_106 = arith.constant 8 : i32
    %331 = arith.muli %c4_i32_105, %c8_i32_106 : i32
    %332 = tpu.assume_multiple %331, 8 : i32
    %333 = arith.truncf %330 : vector<8x32xf32> to vector<8x32xbf16>
    %c0_107 = arith.constant 0 : index
    %c0_108 = arith.constant 0 : index
    %334 = vector.load %arg6[%c0_107, %c0_108] : memref<32x128xbf16, #tpu.memory_space<vmem>>, vector<32x128xbf16>
    %cst_109 = arith.constant dense<0.000000e+00> : vector<8x128xf32>
    %335 = tpu.matmul %333, %334, %cst_109 {dimension_numbers = #tpu.dot_dimension_numbers<[1], [0], [0], [1], [0, 0, 1, 1], [], []>} : vector<8x32xbf16>, vector<32x128xbf16>, vector<8x128xf32> -> vector<8x128xf32>
    %336 = arith.index_cast %332 : i32 to index
    %c0_110 = arith.constant 0 : index
    %337 = vector.load %arg15[%336, %c0_110] : memref<64x128xf32, #tpu.memory_space<vmem>>, vector<8x128xf32>
    %338 = arith.addf %335, %337 : vector<8x128xf32>
    %339 = vector.extract_strided_slice %338 {offsets = [0, 0], sizes = [8, 96], strides = [1, 1]} : vector<8x128xf32> to vector<8x96xf32>
    %340 = arith.negf %339 : vector<8x96xf32>
    %341 = math.exp %340 : vector<8x96xf32>
    %cst_111 = arith.constant 1.000000e+00 : f32
    %342 = vector.broadcast %cst_111 : f32 to vector<8x96xf32>
    %343 = arith.addf %342, %341 : vector<8x96xf32>
    %344 = arith.divf %342, %343 : vector<8x96xf32>
    %345 = vector.extract_strided_slice %344 {offsets = [0, 0], sizes = [8, 32], strides = [1, 1]} : vector<8x96xf32> to vector<8x32xf32>
    %346 = vector.extract_strided_slice %344 {offsets = [0, 32], sizes = [8, 32], strides = [1, 1]} : vector<8x96xf32> to vector<8x32xf32>
    %347 = vector.extract_strided_slice %344 {offsets = [0, 64], sizes = [8, 32], strides = [1, 1]} : vector<8x96xf32> to vector<8x32xf32>
    %348 = vector.extract_strided_slice %338 {offsets = [0, 96], sizes = [8, 32], strides = [1, 1]} : vector<8x128xf32> to vector<8x32xf32>
    %349 = math.tanh %348 : vector<8x32xf32>
    %350 = arith.mulf %346, %328 : vector<8x32xf32>
    %351 = arith.mulf %345, %349 : vector<8x32xf32>
    %352 = arith.addf %350, %351 : vector<8x32xf32>
    %353 = math.tanh %352 : vector<8x32xf32>
    %354 = arith.mulf %347, %353 : vector<8x32xf32>
    %c5_i32_112 = arith.constant 5 : i32
    %c8_i32_113 = arith.constant 8 : i32
    %355 = arith.muli %c5_i32_112, %c8_i32_113 : i32
    %356 = tpu.assume_multiple %355, 8 : i32
    %357 = arith.truncf %354 : vector<8x32xf32> to vector<8x32xbf16>
    %c0_114 = arith.constant 0 : index
    %c0_115 = arith.constant 0 : index
    %358 = vector.load %arg6[%c0_114, %c0_115] : memref<32x128xbf16, #tpu.memory_space<vmem>>, vector<32x128xbf16>
    %cst_116 = arith.constant dense<0.000000e+00> : vector<8x128xf32>
    %359 = tpu.matmul %357, %358, %cst_116 {dimension_numbers = #tpu.dot_dimension_numbers<[1], [0], [0], [1], [0, 0, 1, 1], [], []>} : vector<8x32xbf16>, vector<32x128xbf16>, vector<8x128xf32> -> vector<8x128xf32>
    %360 = arith.index_cast %356 : i32 to index
    %c0_117 = arith.constant 0 : index
    %361 = vector.load %arg15[%360, %c0_117] : memref<64x128xf32, #tpu.memory_space<vmem>>, vector<8x128xf32>
    %362 = arith.addf %359, %361 : vector<8x128xf32>
    %363 = vector.extract_strided_slice %362 {offsets = [0, 0], sizes = [8, 96], strides = [1, 1]} : vector<8x128xf32> to vector<8x96xf32>
    %364 = arith.negf %363 : vector<8x96xf32>
    %365 = math.exp %364 : vector<8x96xf32>
    %cst_118 = arith.constant 1.000000e+00 : f32
    %366 = vector.broadcast %cst_118 : f32 to vector<8x96xf32>
    %367 = arith.addf %366, %365 : vector<8x96xf32>
    %368 = arith.divf %366, %367 : vector<8x96xf32>
    %369 = vector.extract_strided_slice %368 {offsets = [0, 0], sizes = [8, 32], strides = [1, 1]} : vector<8x96xf32> to vector<8x32xf32>
    %370 = vector.extract_strided_slice %368 {offsets = [0, 32], sizes = [8, 32], strides = [1, 1]} : vector<8x96xf32> to vector<8x32xf32>
    %371 = vector.extract_strided_slice %368 {offsets = [0, 64], sizes = [8, 32], strides = [1, 1]} : vector<8x96xf32> to vector<8x32xf32>
    %372 = vector.extract_strided_slice %362 {offsets = [0, 96], sizes = [8, 32], strides = [1, 1]} : vector<8x128xf32> to vector<8x32xf32>
    %373 = math.tanh %372 : vector<8x32xf32>
    %374 = arith.mulf %370, %352 : vector<8x32xf32>
    %375 = arith.mulf %369, %373 : vector<8x32xf32>
    %376 = arith.addf %374, %375 : vector<8x32xf32>
    %377 = math.tanh %376 : vector<8x32xf32>
    %378 = arith.mulf %371, %377 : vector<8x32xf32>
    %c6_i32_119 = arith.constant 6 : i32
    %c8_i32_120 = arith.constant 8 : i32
    %379 = arith.muli %c6_i32_119, %c8_i32_120 : i32
    %380 = tpu.assume_multiple %379, 8 : i32
    %381 = arith.truncf %378 : vector<8x32xf32> to vector<8x32xbf16>
    %c0_121 = arith.constant 0 : index
    %c0_122 = arith.constant 0 : index
    %382 = vector.load %arg6[%c0_121, %c0_122] : memref<32x128xbf16, #tpu.memory_space<vmem>>, vector<32x128xbf16>
    %cst_123 = arith.constant dense<0.000000e+00> : vector<8x128xf32>
    %383 = tpu.matmul %381, %382, %cst_123 {dimension_numbers = #tpu.dot_dimension_numbers<[1], [0], [0], [1], [0, 0, 1, 1], [], []>} : vector<8x32xbf16>, vector<32x128xbf16>, vector<8x128xf32> -> vector<8x128xf32>
    %384 = arith.index_cast %380 : i32 to index
    %c0_124 = arith.constant 0 : index
    %385 = vector.load %arg15[%384, %c0_124] : memref<64x128xf32, #tpu.memory_space<vmem>>, vector<8x128xf32>
    %386 = arith.addf %383, %385 : vector<8x128xf32>
    %387 = vector.extract_strided_slice %386 {offsets = [0, 0], sizes = [8, 96], strides = [1, 1]} : vector<8x128xf32> to vector<8x96xf32>
    %388 = arith.negf %387 : vector<8x96xf32>
    %389 = math.exp %388 : vector<8x96xf32>
    %cst_125 = arith.constant 1.000000e+00 : f32
    %390 = vector.broadcast %cst_125 : f32 to vector<8x96xf32>
    %391 = arith.addf %390, %389 : vector<8x96xf32>
    %392 = arith.divf %390, %391 : vector<8x96xf32>
    %393 = vector.extract_strided_slice %392 {offsets = [0, 0], sizes = [8, 32], strides = [1, 1]} : vector<8x96xf32> to vector<8x32xf32>
    %394 = vector.extract_strided_slice %392 {offsets = [0, 32], sizes = [8, 32], strides = [1, 1]} : vector<8x96xf32> to vector<8x32xf32>
    %395 = vector.extract_strided_slice %392 {offsets = [0, 64], sizes = [8, 32], strides = [1, 1]} : vector<8x96xf32> to vector<8x32xf32>
    %396 = vector.extract_strided_slice %386 {offsets = [0, 96], sizes = [8, 32], strides = [1, 1]} : vector<8x128xf32> to vector<8x32xf32>
    %397 = math.tanh %396 : vector<8x32xf32>
    %398 = arith.mulf %394, %376 : vector<8x32xf32>
    %399 = arith.mulf %393, %397 : vector<8x32xf32>
    %400 = arith.addf %398, %399 : vector<8x32xf32>
    %401 = math.tanh %400 : vector<8x32xf32>
    %402 = arith.mulf %395, %401 : vector<8x32xf32>
    %c7_i32_126 = arith.constant 7 : i32
    %c8_i32_127 = arith.constant 8 : i32
    %403 = arith.muli %c7_i32_126, %c8_i32_127 : i32
    %404 = tpu.assume_multiple %403, 8 : i32
    %405 = arith.truncf %402 : vector<8x32xf32> to vector<8x32xbf16>
    %c0_128 = arith.constant 0 : index
    %c0_129 = arith.constant 0 : index
    %406 = vector.load %arg6[%c0_128, %c0_129] : memref<32x128xbf16, #tpu.memory_space<vmem>>, vector<32x128xbf16>
    %cst_130 = arith.constant dense<0.000000e+00> : vector<8x128xf32>
    %407 = tpu.matmul %405, %406, %cst_130 {dimension_numbers = #tpu.dot_dimension_numbers<[1], [0], [0], [1], [0, 0, 1, 1], [], []>} : vector<8x32xbf16>, vector<32x128xbf16>, vector<8x128xf32> -> vector<8x128xf32>
    %408 = arith.index_cast %404 : i32 to index
    %c0_131 = arith.constant 0 : index
    %409 = vector.load %arg15[%408, %c0_131] : memref<64x128xf32, #tpu.memory_space<vmem>>, vector<8x128xf32>
    %410 = arith.addf %407, %409 : vector<8x128xf32>
    %411 = vector.extract_strided_slice %410 {offsets = [0, 0], sizes = [8, 96], strides = [1, 1]} : vector<8x128xf32> to vector<8x96xf32>
    %412 = arith.negf %411 : vector<8x96xf32>
    %413 = math.exp %412 : vector<8x96xf32>
    %cst_132 = arith.constant 1.000000e+00 : f32
    %414 = vector.broadcast %cst_132 : f32 to vector<8x96xf32>
    %415 = arith.addf %414, %413 : vector<8x96xf32>
    %416 = arith.divf %414, %415 : vector<8x96xf32>
    %417 = vector.extract_strided_slice %416 {offsets = [0, 0], sizes = [8, 32], strides = [1, 1]} : vector<8x96xf32> to vector<8x32xf32>
    %418 = vector.extract_strided_slice %416 {offsets = [0, 32], sizes = [8, 32], strides = [1, 1]} : vector<8x96xf32> to vector<8x32xf32>
    %419 = vector.extract_strided_slice %416 {offsets = [0, 64], sizes = [8, 32], strides = [1, 1]} : vector<8x96xf32> to vector<8x32xf32>
    %420 = vector.extract_strided_slice %410 {offsets = [0, 96], sizes = [8, 32], strides = [1, 1]} : vector<8x128xf32> to vector<8x32xf32>
    %421 = math.tanh %420 : vector<8x32xf32>
    %422 = arith.mulf %418, %400 : vector<8x32xf32>
    %423 = arith.mulf %417, %421 : vector<8x32xf32>
    %424 = arith.addf %422, %423 : vector<8x32xf32>
    %425 = math.tanh %424 : vector<8x32xf32>
    %426 = arith.mulf %419, %425 : vector<8x32xf32>
    %c8_i32_133 = arith.constant 8 : i32
    %427 = arith.truncf %426 : vector<8x32xf32> to vector<8x32xbf16>
    %c0_134 = arith.constant 0 : index
    %c0_135 = arith.constant 0 : index
    %428 = vector.load %arg8[%c0_134, %c0_135] : memref<32x4xbf16, #tpu.memory_space<vmem>>, vector<32x4xbf16>
    %cst_136 = arith.constant dense<0.000000e+00> : vector<8x4xf32>
    %429 = tpu.matmul %427, %428, %cst_136 {dimension_numbers = #tpu.dot_dimension_numbers<[1], [0], [0], [1], [0, 0, 1, 1], [], []>} : vector<8x32xbf16>, vector<32x4xbf16>, vector<8x4xf32> -> vector<8x4xf32>
    %c0_137 = arith.constant 0 : index
    %c0_138 = arith.constant 0 : index
    %430 = vector.load %arg9[%c0_137, %c0_138] : memref<1x4xf32, #tpu.memory_space<vmem>>, vector<1x4xf32>
    %431 = vector.broadcast %430 : vector<1x4xf32> to vector<8x4xf32>
    %432 = arith.addf %429, %431 : vector<8x4xf32>
    %433 = arith.mulf %432, %432 : vector<8x4xf32>
    %434 = arith.truncf %433 : vector<8x4xf32> to vector<8x4xbf16>
    %c0_139 = arith.constant 0 : index
    %c0_140 = arith.constant 0 : index
    %435 = vector.load %arg10[%c0_139, %c0_140] : memref<4x4xbf16, #tpu.memory_space<vmem>>, vector<4x4xbf16>
    %cst_141 = arith.constant dense<0.000000e+00> : vector<8x4xf32>
    %436 = tpu.matmul %434, %435, %cst_141 {dimension_numbers = #tpu.dot_dimension_numbers<[1], [0], [0], [1], [0, 0, 1, 1], [], []>} : vector<8x4xbf16>, vector<4x4xbf16>, vector<8x4xf32> -> vector<8x4xf32>
    %c0_142 = arith.constant 0 : index
    %c0_143 = arith.constant 0 : index
    %437 = vector.load %arg11[%c0_142, %c0_143] : memref<1x4xf32, #tpu.memory_space<vmem>>, vector<1x4xf32>
    %438 = vector.broadcast %437 : vector<1x4xf32> to vector<8x4xf32>
    %439 = arith.addf %436, %438 : vector<8x4xf32>
    %440 = arith.mulf %432, %432 : vector<8x4xf32>
    %441 = arith.mulf %440, %432 : vector<8x4xf32>
    %442 = arith.truncf %441 : vector<8x4xf32> to vector<8x4xbf16>
    %c0_144 = arith.constant 0 : index
    %c0_145 = arith.constant 0 : index
    %443 = vector.load %arg12[%c0_144, %c0_145] : memref<4x4xbf16, #tpu.memory_space<vmem>>, vector<4x4xbf16>
    %cst_146 = arith.constant dense<0.000000e+00> : vector<8x4xf32>
    %444 = tpu.matmul %442, %443, %cst_146 {dimension_numbers = #tpu.dot_dimension_numbers<[1], [0], [0], [1], [0, 0, 1, 1], [], []>} : vector<8x4xbf16>, vector<4x4xbf16>, vector<8x4xf32> -> vector<8x4xf32>
    %c0_147 = arith.constant 0 : index
    %c0_148 = arith.constant 0 : index
    %445 = vector.load %arg13[%c0_147, %c0_148] : memref<1x4xf32, #tpu.memory_space<vmem>>, vector<1x4xf32>
    %446 = vector.broadcast %445 : vector<1x4xf32> to vector<8x4xf32>
    %447 = arith.addf %444, %446 : vector<8x4xf32>
    %448 = arith.addf %432, %439 : vector<8x4xf32>
    %449 = arith.addf %448, %447 : vector<8x4xf32>
    %c0_149 = arith.constant 0 : index
    %c0_150 = arith.constant 0 : index
    %450 = vector.load %arg14[%c0_149, %c0_150] : memref<8x4xf32, #tpu.memory_space<vmem>>, vector<8x4xf32>
    tpu.vector_store %arg14[%c0_149, %c0_150], %449 {strides = array<i32>} : memref<8x4xf32, #tpu.memory_space<vmem>>, vector<8x4xf32>,
    return
  }
  func.func @transform_0(%arg0: i32) -> (i32, i32, i32) {
    %c0_i32 = arith.constant 0 : i32
    %c0_i32_0 = arith.constant 0 : i32
    %c0_i32_1 = arith.constant 0 : i32
    return %arg0, %c0_i32, %c0_i32_0 : i32, i32, i32
  }
  func.func @transform_1(%arg0: i32) -> (i32, i32) {
    %c0_i32 = arith.constant 0 : i32
    %c0_i32_0 = arith.constant 0 : i32
    %c0_i32_1 = arith.constant 0 : i32
    return %c0_i32, %c0_i32_0 : i32, i32
  }
  func.func @transform_2(%arg0: i32) -> (i32, i32) {
    %c0_i32 = arith.constant 0 : i32
    %c0_i32_0 = arith.constant 0 : i32
    %c0_i32_1 = arith.constant 0 : i32
    return %c0_i32, %c0_i32_0 : i32, i32
  }
  func.func @transform_3(%arg0: i32) -> (i32, i32) {
    %c0_i32 = arith.constant 0 : i32
    %c0_i32_0 = arith.constant 0 : i32
    %c0_i32_1 = arith.constant 0 : i32
    return %c0_i32, %c0_i32_0 : i32, i32
  }
  func.func @transform_4(%arg0: i32) -> (i32, i32) {
    %c0_i32 = arith.constant 0 : i32
    %c0_i32_0 = arith.constant 0 : i32
    %c0_i32_1 = arith.constant 0 : i32
    return %c0_i32, %c0_i32_0 : i32, i32
  }
  func.func @transform_5(%arg0: i32) -> (i32, i32) {
    %c0_i32 = arith.constant 0 : i32
    %c0_i32_0 = arith.constant 0 : i32
    %c0_i32_1 = arith.constant 0 : i32
    return %c0_i32, %c0_i32_0 : i32, i32
  }
  func.func @transform_6(%arg0: i32) -> (i32, i32) {
    %c0_i32 = arith.constant 0 : i32
    %c0_i32_0 = arith.constant 0 : i32
    %c0_i32_1 = arith.constant 0 : i32
    return %c0_i32, %c0_i32_0 : i32, i32
  }
  func.func @transform_7(%arg0: i32) -> (i32, i32) {
    %c0_i32 = arith.constant 0 : i32
    %c0_i32_0 = arith.constant 0 : i32
    %c0_i32_1 = arith.constant 0 : i32
    return %c0_i32, %c0_i32_0 : i32, i32
  }
  func.func @transform_8(%arg0: i32) -> (i32, i32) {
    %c0_i32 = arith.constant 0 : i32
    %c0_i32_0 = arith.constant 0 : i32
    %c0_i32_1 = arith.constant 0 : i32
    return %c0_i32, %c0_i32_0 : i32, i32
  }
  func.func @transform_9(%arg0: i32) -> (i32, i32) {
    %c0_i32 = arith.constant 0 : i32
    %c0_i32_0 = arith.constant 0 : i32
    %c0_i32_1 = arith.constant 0 : i32
    return %c0_i32, %c0_i32_0 : i32, i32
  }
  func.func @transform_10(%arg0: i32) -> (i32, i32) {
    %c0_i32 = arith.constant 0 : i32
    %c0_i32_0 = arith.constant 0 : i32
    %c0_i32_1 = arith.constant 0 : i32
    return %c0_i32, %c0_i32_0 : i32, i32
  }
  func.func @transform_11(%arg0: i32) -> (i32, i32) {
    %c0_i32 = arith.constant 0 : i32
    %c0_i32_0 = arith.constant 0 : i32
    %c0_i32_1 = arith.constant 0 : i32
    return %c0_i32, %c0_i32_0 : i32, i32
  }
  func.func @transform_12(%arg0: i32) -> (i32, i32) {
    %c0_i32 = arith.constant 0 : i32
    %c0_i32_0 = arith.constant 0 : i32
    %c0_i32_1 = arith.constant 0 : i32
    return %c0_i32, %c0_i32_0 : i32, i32
  }
  func.func @transform_13(%arg0: i32) -> (i32, i32) {
    %c0_i32 = arith.constant 0 : i32
    %c0_i32_0 = arith.constant 0 : i32
    return %arg0, %c0_i32 : i32, i32
  }
}

</mosaic_0001>

<llo_original>
// kernel: lstm_model_forward.1
$region0: #{lstm_model_forward.1}
  #allocation0 [shape = 'u32[]', space=smem, size = 0x4, offset = 0x4, fixed_abs, tag = 'smem constant byte address 0x4 - core index']
  #allocation1 [shape = 'u32[144,128]{1,0:T(1,128)}', space=vmem, size = 0x12000, scoped, tag = 'internal scratch']
  #allocation2 [shape = 'f32[64,128]{1,0:T(8,128)}', space=vmem, size = 0x8000, scoped, tag = 'scratch operand']
  #allocation3 [shape = 'bf16[64,32]{1,0:T(8,128)(2,1)}', space=vmem, size = 0x4000, scoped, tag = 'scratch operand']
  %s0 = inlined_call_operand.vmem [shape: bf16[1,64,8], index: 0, kind: input, shape index: {}]
  %s1 = inlined_call_operand.vmem [shape: bf16[8,128], index: 1, kind: input, shape index: {}]
  %s2 = inlined_call_operand.vmem [shape: bf16[32,128], index: 2, kind: input, shape index: {}]
  %s3 = inlined_call_operand.vmem [shape: f32[1,128], index: 3, kind: input, shape index: {}]
  %s4 = inlined_call_operand.vmem [shape: bf16[32,128], index: 4, kind: input, shape index: {}]
  %s5 = inlined_call_operand.vmem [shape: bf16[32,128], index: 5, kind: input, shape index: {}]
  %s6 = inlined_call_operand.vmem [shape: f32[1,128], index: 6, kind: input, shape index: {}]
  %s7 = inlined_call_operand.vmem [shape: bf16[32,4], index: 7, kind: input, shape index: {}]
  %s8 = inlined_call_operand.vmem [shape: f32[1,4], index: 8, kind: input, shape index: {}]
  %s9 = inlined_call_operand.vmem [shape: bf16[4,4], index: 9, kind: input, shape index: {}]
  %s10 = inlined_call_operand.vmem [shape: f32[1,4], index: 10, kind: input, shape index: {}]
  %s11 = inlined_call_operand.vmem [shape: bf16[4,4], index: 11, kind: input, shape index: {}]
  %s12 = inlined_call_operand.vmem [shape: f32[1,4], index: 12, kind: input, shape index: {}]
  %s13 = inlined_call_operand.vmem [shape: f32[8,4], index: 13, kind: output, shape index: {}]
  %s14 = sld [smem:[#allocation0]]
  $region62: #{lstm_model_forward.1} parent=0
    _
  %s16 = ssub.s32 1, %s14
  %s17 = scalar_select 0, %s16, %s14
  // Predicated region
  $region2: #{lstm_model_forward.1} parent=0 // pred_check
    _
  $region3: #{lstm_model_forward.1} parent=0 // pred_check_branch
    %19 = sbr.rel (0) target = $region5
  $region4: #{lstm_model_forward.1} parent=0 // pred_region
    _
  $region5: #{lstm_model_forward.1} parent=0 // pred_fallthru
    _
  // Predicated region
  $region6: #{lstm_model_forward.1} parent=0 // pred_check
    _
  $region7: #{lstm_model_forward.1} parent=0 // pred_check_branch
    %21 = sbr.rel (0) target = $region9
  $region8: #{lstm_model_forward.1} parent=0 // pred_region
    _
  $region9: #{lstm_model_forward.1} parent=0 // pred_fallthru
    _
  // Predicated region
  $region10: #{lstm_model_forward.1} parent=0 // pred_check
    _
  $region11: #{lstm_model_forward.1} parent=0 // pred_check_branch
    %23 = sbr.rel (0) target = $region13
  $region12: #{lstm_model_forward.1} parent=0 // pred_region
    _
  $region13: #{lstm_model_forward.1} parent=0 // pred_fallthru
    _
  // Predicated region
  $region14: #{lstm_model_forward.1} parent=0 // pred_check
    _
  $region15: #{lstm_model_forward.1} parent=0 // pred_check_branch
    %25 = sbr.rel (0) target = $region17
  $region16: #{lstm_model_forward.1} parent=0 // pred_region
    _
  $region17: #{lstm_model_forward.1} parent=0 // pred_fallthru
    _
  // Predicated region
  $region18: #{lstm_model_forward.1} parent=0 // pred_check
    _
  $region19: #{lstm_model_forward.1} parent=0 // pred_check_branch
    %27 = sbr.rel (0) target = $region21
  $region20: #{lstm_model_forward.1} parent=0 // pred_region
    _
  $region21: #{lstm_model_forward.1} parent=0 // pred_fallthru
    _
  // Predicated region
  $region22: #{lstm_model_forward.1} parent=0 // pred_check
    _
  $region23: #{lstm_model_forward.1} parent=0 // pred_check_branch
    %29 = sbr.rel (0) target = $region25
  $region24: #{lstm_model_forward.1} parent=0 // pred_region
    _
  $region25: #{lstm_model_forward.1} parent=0 // pred_fallthru
    _
  // Predicated region
  $region26: #{lstm_model_forward.1} parent=0 // pred_check
    _
  $region27: #{lstm_model_forward.1} parent=0 // pred_check_branch
    %31 = sbr.rel (0) target = $region29
  $region28: #{lstm_model_forward.1} parent=0 // pred_region
    _
  $region29: #{lstm_model_forward.1} parent=0 // pred_fallthru
    _
  // Predicated region
  $region30: #{lstm_model_forward.1} parent=0 // pred_check
    _
  $region31: #{lstm_model_forward.1} parent=0 // pred_check_branch
    %33 = sbr.rel (0) target = $region33
  $region32: #{lstm_model_forward.1} parent=0 // pred_region
    _
  $region33: #{lstm_model_forward.1} parent=0 // pred_fallthru
    _
  // Predicated region
  $region34: #{lstm_model_forward.1} parent=0 // pred_check
    _
  $region35: #{lstm_model_forward.1} parent=0 // pred_check_branch
    %35 = sbr.rel (0) target = $region37
  $region36: #{lstm_model_forward.1} parent=0 // pred_region
    _
  $region37: #{lstm_model_forward.1} parent=0 // pred_fallthru
    _
  // Predicated region
  $region38: #{lstm_model_forward.1} parent=0 // pred_check
    _
  $region39: #{lstm_model_forward.1} parent=0 // pred_check_branch
    %37 = sbr.rel (0) target = $region41
  $region40: #{lstm_model_forward.1} parent=0 // pred_region
    _
  $region41: #{lstm_model_forward.1} parent=0 // pred_fallthru
    _
  // Predicated region
  $region42: #{lstm_model_forward.1} parent=0 // pred_check
    _
  $region43: #{lstm_model_forward.1} parent=0 // pred_check_branch
    %39 = sbr.rel (0) target = $region45
  $region44: #{lstm_model_forward.1} parent=0 // pred_region
    _
  $region45: #{lstm_model_forward.1} parent=0 // pred_fallthru
    _
  // Predicated region
  $region46: #{lstm_model_forward.1} parent=0 // pred_check
    _
  $region47: #{lstm_model_forward.1} parent=0 // pred_check_branch
    %41 = sbr.rel (0) target = $region49
  $region48: #{lstm_model_forward.1} parent=0 // pred_region
    _
  $region49: #{lstm_model_forward.1} parent=0 // pred_fallthru
    _
  // Predicated region
  $region50: #{lstm_model_forward.1} parent=0 // pred_check
    _
  $region51: #{lstm_model_forward.1} parent=0 // pred_check_branch
    %43 = sbr.rel (0) target = $region53
  $region52: #{lstm_model_forward.1} parent=0 // pred_region
    _
  $region53: #{lstm_model_forward.1} parent=0 // pred_fallthru
    _
  %v45 = vld [vmem:[%s0] sm:$0xf]
  %v46 = vld [vmem:[%s0 + $0x4] sm:$0xf]
  %v47 = vld [vmem:[%s0 + $0x8] sm:$0xf]
  %v48 = vld [vmem:[%s0 + $0xc] sm:$0xf]
  %v49 = vld [vmem:[%s0 + $0x10] sm:$0xf]
  %v50 = vld [vmem:[%s0 + $0x14] sm:$0xf]
  %v51 = vld [vmem:[%s0 + $0x18] sm:$0xf]
  %v52 = vld [vmem:[%s0 + $0x1c] sm:$0xf]
  %v53 = vld [vmem:[%s1] sm:$0xf]
  %v54 = vld [vmem:[%s3] sm:$0x1]
  %v56 = vlaneseq
  %v57 = vshrl.u32 %v56, 7
  %v58 = vsub.s32 0, %v57
  %v59 = vrot.slane %v54, %v58
  %v69 = vunpack.c.l.b16 %v45
  %v70 = vunpack.c.l.b16 %v46
  %v71 = vunpack.c.l.b16 %v47
  %v72 = vunpack.c.l.b16 %v48
  %v73 = vunpack.c.l.b16 %v49
  %v74 = vunpack.c.l.b16 %v50
  %v75 = vunpack.c.l.b16 %v51
  %v76 = vunpack.c.l.b16 %v52
  %v77 = vpack.c.b16 %v70, %v69
  %v78 = vpack.c.b16 %v72, %v71
  %v79 = vpack.c.b16 %v74, %v73
  %v80 = vpack.c.b16 %v76, %v75
  %vm81 = vcmask 64512
  %v83 = vsel %vm81, %v77, 0
  %v86 = vsel %vm81, %v78, 0
  %v89 = vsel %vm81, %v79, 0
  %v92 = vsel %vm81, %v80, 0
  %vm94 = vcmask 1043456
  %v96 = vsel %vm94, %v53, 0
  %98 = vmatprep.subr.bf16.mxu0 0
  %99 = vmatpush1.bf16.msra.mxu0 0
  %100 = vmatprep.subr.bf16.mxu0 0
  %101 = vmatpush1.bf16.msra.mxu0 0
  %102 = vmatprep.subr.bf16.mxu0 0
  %103 = vmatpush1.bf16.msra.mxu0 0
  %104 = vmatprep.subr.bf16.mxu0 0
  %105 = vmatpush1.bf16.msra.mxu0 0
  %106 = vmatprep.subr.bf16.mxu0 0
  %107 = vmatpush1.bf16.msra.mxu0 0
  %108 = vmatprep.subr.bf16.mxu0 0
  %109 = vmatpush1.bf16.msra.mxu0 0
  %110 = vmatprep.subr.bf16.mxu0 0
  %111 = vmatpush1.bf16.msra.mxu0 0
  %112 = vmatprep.subr.bf16.mxu0 0
  %113 = vmatpush1.bf16.msra.mxu0 %v96
  %114 = vmatprep.subr.bf16.mxu0 0
  %115 = vmatpush2.bf16.msra.mxu0 0
  %116 = vmatprep.subr.bf16.mxu0 0
  %117 = vmatpush2.bf16.msra.mxu0 0
  %118 = vmatprep.subr.bf16.mxu0 0
  %119 = vmatpush2.bf16.msra.mxu0 0
  %120 = vmatprep.subr.bf16.mxu0 0
  %121 = vmatpush2.bf16.msra.mxu0 0
  %122 = vmatprep.subr.bf16.mxu0 0
  %123 = vmatpush2.bf16.msra.mxu0 0
  %124 = vmatprep.subr.bf16.mxu0 0
  %125 = vmatpush2.bf16.msra.mxu0 0
  %126 = vmatprep.subr.bf16.mxu0 0
  %127 = vmatpush2.bf16.msra.mxu0 0
  %128 = vmatprep.subr.bf16.mxu0 0
  %129 = vmatpush2.bf16.msra.mxu0 0
  %130 = vmatprep.mubr.bf16.mxu0 0
  %131 = vmatmul.mubr.bf16.gmra.mxu0 %v83
  %v132 = vpop.f32.mrf.mxu0
  %v133 = vadd.f32 %v59, %v132
  %v134 = vpop.f32.mrf.mxu0
  %v135 = vpop.f32.mrf.mxu0
  %v136 = vadd.f32 %v59, %v135
  %v137 = vpop.f32.mrf.mxu0
  %138 = vmatprep.mubr.bf16.mxu0 0
  %139 = vmatmul.mubr.bf16.gmra.mxu0 %v86
  %v140 = vpop.f32.mrf.mxu0
  %v141 = vadd.f32 %v59, %v140
  %v142 = vpop.f32.mrf.mxu0
  %v143 = vpop.f32.mrf.mxu0
  %v144 = vadd.f32 %v59, %v143
  %v145 = vpop.f32.mrf.mxu0
  %146 = vmatprep.mubr.bf16.mxu0 0
  %147 = vmatmul.mubr.bf16.gmra.mxu0 %v89
  %v148 = vpop.f32.mrf.mxu0
  %v149 = vadd.f32 %v59, %v148
  %v150 = vpop.f32.mrf.mxu0
  %v151 = vpop.f32.mrf.mxu0
  %v152 = vadd.f32 %v59, %v151
  %v153 = vpop.f32.mrf.mxu0
  %154 = vmatprep.mubr.bf16.mxu0 0
  %155 = vmatmul.mubr.bf16.gmra.mxu0 %v92
  %v156 = vpop.f32.mrf.mxu0
  %v157 = vadd.f32 %v59, %v156
  %v158 = vpop.f32.mrf.mxu0
  %v159 = vpop.f32.mrf.mxu0
  %v160 = vadd.f32 %v59, %v159
  %v161 = vpop.f32.mrf.mxu0
  %162 = vdwg.mxu0
  %163 = vst [vmem:[#allocation2] sm:$0xff] %v133
  %164 = vst [vmem:[#allocation2 + $0x8] sm:$0xff] %v136
  %165 = vst [vmem:[#allocation2 + $0x10] sm:$0xff] %v141
  %166 = vst [vmem:[#allocation2 + $0x18] sm:$0xff] %v144
  %167 = vst [vmem:[#allocation2 + $0x20] sm:$0xff] %v149
  %168 = vst [vmem:[#allocation2 + $0x28] sm:$0xff] %v152
  %169 = vst [vmem:[#allocation2 + $0x30] sm:$0xff] %v157
  %170 = vst [vmem:[#allocation2 + $0x38] sm:$0xff] %v160
  %v171 = vld [vmem:[%s2] sm:$0xf]
  %v172 = vld [vmem:[%s2 + $0x4] sm:$0xf]
  %v173 = vld [vmem:[%s2 + $0x8] sm:$0xf]
  %v174 = vld [vmem:[%s2 + $0xc] sm:$0xf]
  %v175 = vld [vmem:[#allocation2] sm:$0xff]
  %v180 = vunpack.c.l.b16 %v171
  %v181 = vunpack.c.l.b16 %v172
  %v182 = vunpack.c.l.b16 %v173
  %v183 = vunpack.c.l.b16 %v174
  %v184 = vpack.c.b16 %v181, %v180
  %v185 = vpack.c.b16 %v183, %v182
  %vm188 = vcmask 261120
  %v190 = vsel %vm188, 0, 0
  %192 = vmatprep.subr.bf16.mxu0 0
  %193 = vmatpush1.bf16.msra.mxu0 0
  %194 = vmatprep.subr.bf16.mxu0 0
  %195 = vmatpush1.bf16.msra.mxu0 0
  %196 = vmatprep.subr.bf16.mxu0 0
  %197 = vmatpush1.bf16.msra.mxu0 0
  %198 = vmatprep.subr.bf16.mxu0 0
  %199 = vmatpush1.bf16.msra.mxu0 0
  %200 = vmatprep.subr.bf16.mxu0 0
  %201 = vmatpush1.bf16.msra.mxu0 0
  %202 = vmatprep.subr.bf16.mxu0 0
  %203 = vmatpush1.bf16.msra.mxu0 0
  %204 = vmatprep.subr.bf16.mxu0 0
  %205 = vmatpush1.bf16.msra.mxu0 %v185
  %206 = vmatprep.subr.bf16.mxu0 0
  %207 = vmatpush1.bf16.msra.mxu0 %v184
  %208 = vmatprep.subr.bf16.mxu0 0
  %209 = vmatpush2.bf16.msra.mxu0 0
  %210 = vmatprep.subr.bf16.mxu0 0
  %211 = vmatpush2.bf16.msra.mxu0 0
  %212 = vmatprep.subr.bf16.mxu0 0
  %213 = vmatpush2.bf16.msra.mxu0 0
  %214 = vmatprep.subr.bf16.mxu0 0
  %215 = vmatpush2.bf16.msra.mxu0 0
  %216 = vmatprep.subr.bf16.mxu0 0
  %217 = vmatpush2.bf16.msra.mxu0 0
  %218 = vmatprep.subr.bf16.mxu0 0
  %219 = vmatpush2.bf16.msra.mxu0 0
  %220 = vmatprep.subr.bf16.mxu0 0
  %221 = vmatpush2.bf16.msra.mxu0 0
  %222 = vmatprep.subr.bf16.mxu0 0
  %223 = vmatpush2.bf16.msra.mxu0 0
  %224 = vmatprep.mubr.bf16.mxu0 0
  %225 = vmatmul.mubr.bf16.gmra.mxu0 %v190
  %v226 = vpop.f32.mrf.mxu0
  %v227 = vadd.f32 %v175, %v226
  %v228 = vpop.f32.mrf.mxu0
  %v229 = vpop.f32.mrf.mxu0
  %v230 = vpop.f32.mrf.mxu0
  %231 = vdwg.mxu0
  %v232 = vxor.u32 %v227, 2147483648
  %v233 = vmul.f32 %v232, 1.442695
  %v234 = vpow.pop %v233
  %v235 = vadd.f32 %v234, 1.0
  %v236 = vrcp.pop %v235
  %v237 = vmul.f32 1.0, %v236
  %v238 = vtanh.pop %v227
  %v239 = vmul.f32 %v237, 0.0
  %241 = vrot.lane.b32.xlu0 %v238, 32
  %v242 = vpop.permute.xlu0 %241
  %v244 = vmul.f32 %v237, %v242
  %246 = vrot.lane.b32.xlu0 %v244, 32
  %v247 = vpop.permute.xlu0 %246
  %v249 = vadd.f32 %v239, %v247
  %v250 = vtanh.pop %v249
  %252 = vrot.lane.b32.xlu0 %v250, 32
  %v253 = vpop.permute.xlu0 %252
  %v255 = vmul.f32 %v237, %v253
  %v256 = vpack.c.bf16 %v255, %v255
  %v258 = vunpack.c.l.b16 %v256
  %v259 = vpack.c.b16 %v258, %v258
  %260 = vrot.lane.b32.xlu0 %v259, 64
  %v261 = vpop.permute.xlu0 %260
  %vm263 = vcmask 257024
  %264 = vst.msk [vmem:[#allocation3] sm:$0xf] %vm263, %v261
  %v265 = vld [vmem:[%s2] sm:$0xf]
  %v266 = vld [vmem:[%s2 + $0x4] sm:$0xf]
  %v267 = vld [vmem:[%s2 + $0x8] sm:$0xf]
  %v268 = vld [vmem:[%s2 + $0xc] sm:$0xf]
  %s269 = scalar_lea.vmem [#allocation2], 8
  %v270 = vld [vmem:[%s269] sm:$0xff]
  %271 = vrot.lane.b32.xlu0 %v256, 64
  %v272 = vpop.permute.xlu0 %271
  %v277 = vunpack.c.l.b16 %v265
  %v278 = vunpack.c.l.b16 %v266
  %v279 = vunpack.c.l.b16 %v267
  %v280 = vunpack.c.l.b16 %v268
  %v281 = vpack.c.b16 %v278, %v277
  %v282 = vpack.c.b16 %v280, %v279
  %v286 = vsel %vm188, %v272, 0
  %288 = vmatprep.subr.bf16.mxu0 0
  %289 = vmatpush1.bf16.msra.mxu0 0
  %290 = vmatprep.subr.bf16.mxu0 0
  %291 = vmatpush1.bf16.msra.mxu0 0
  %292 = vmatprep.subr.bf16.mxu0 0
  %293 = vmatpush1.bf16.msra.mxu0 0
  %294 = vmatprep.subr.bf16.mxu0 0
  %295 = vmatpush1.bf16.msra.mxu0 0
  %296 = vmatprep.subr.bf16.mxu0 0
  %297 = vmatpush1.bf16.msra.mxu0 0
  %298 = vmatprep.subr.bf16.mxu0 0
  %299 = vmatpush1.bf16.msra.mxu0 0
  %300 = vmatprep.subr.bf16.mxu0 0
  %301 = vmatpush1.bf16.msra.mxu0 %v282
  %302 = vmatprep.subr.bf16.mxu0 0
  %303 = vmatpush1.bf16.msra.mxu0 %v281
  %304 = vmatprep.subr.bf16.mxu0 0
  %305 = vmatpush2.bf16.msra.mxu0 0
  %306 = vmatprep.subr.bf16.mxu0 0
  %307 = vmatpush2.bf16.msra.mxu0 0
  %308 = vmatprep.subr.bf16.mxu0 0
  %309 = vmatpush2.bf16.msra.mxu0 0
  %310 = vmatprep.subr.bf16.mxu0 0
  %311 = vmatpush2.bf16.msra.mxu0 0
  %312 = vmatprep.subr.bf16.mxu0 0
  %313 = vmatpush2.bf16.msra.mxu0 0
  %314 = vmatprep.subr.bf16.mxu0 0
  %315 = vmatpush2.bf16.msra.mxu0 0
  %316 = vmatprep.subr.bf16.mxu0 0
  %317 = vmatpush2.bf16.msra.mxu0 0
  %318 = vmatprep.subr.bf16.mxu0 0
  %319 = vmatpush2.bf16.msra.mxu0 0
  %320 = vmatprep.mubr.bf16.mxu0 0
  %321 = vmatmul.mubr.bf16.gmra.mxu0 %v286
  %v322 = vpop.f32.mrf.mxu0
  %v323 = vadd.f32 %v270, %v322
  %v324 = vpop.f32.mrf.mxu0
  %v325 = vpop.f32.mrf.mxu0
  %v326 = vpop.f32.mrf.mxu0
  %327 = vdwg.mxu0
  %v328 = vxor.u32 %v323, 2147483648
  %v329 = vmul.f32 %v328, 1.442695
  %v330 = vpow.pop %v329
  %v331 = vadd.f32 %v330, 1.0
  %v332 = vrcp.pop %v331
  %v333 = vmul.f32 1.0, %v332
  %v334 = vtanh.pop %v323
  %v335 = vmul.f32 %v333, %v249
  %337 = vrot.lane.b32.xlu0 %v334, 32
  %v338 = vpop.permute.xlu0 %337
  %v340 = vmul.f32 %v333, %v338
  %342 = vrot.lane.b32.xlu0 %v340, 32
  %v343 = vpop.permute.xlu0 %342
  %v345 = vadd.f32 %v335, %v343
  %v346 = vtanh.pop %v345
  %348 = vrot.lane.b32.xlu0 %v346, 32
  %v349 = vpop.permute.xlu0 %348
  %v351 = vmul.f32 %v333, %v349
  %v352 = vpack.c.bf16 %v351, %v351
  %v354 = vunpack.c.l.b16 %v352
  %v355 = vpack.c.b16 %v354, %v354
  %356 = vrot.lane.b32.xlu0 %v355, 64
  %v357 = vpop.permute.xlu0 %356
  %s359 = scalar_lea.vmem [#allocation3], 4
  %360 = vst.msk [vmem:[%s359] sm:$0xf] %vm263, %v357
  %v361 = vld [vmem:[%s2] sm:$0xf]
  %v362 = vld [vmem:[%s2 + $0x4] sm:$0xf]
  %v363 = vld [vmem:[%s2 + $0x8] sm:$0xf]
  %v364 = vld [vmem:[%s2 + $0xc] sm:$0xf]
  %s365 = scalar_lea.vmem [#allocation2], 16
  %v366 = vld [vmem:[%s365] sm:$0xff]
  %367 = vrot.lane.b32.xlu0 %v352, 64
  %v368 = vpop.permute.xlu0 %367
  %v373 = vunpack.c.l.b16 %v361
  %v374 = vunpack.c.l.b16 %v362
  %v375 = vunpack.c.l.b16 %v363
  %v376 = vunpack.c.l.b16 %v364
  %v377 = vpack.c.b16 %v374, %v373
  %v378 = vpack.c.b16 %v376, %v375
  %v382 = vsel %vm188, %v368, 0
  %384 = vmatprep.subr.bf16.mxu0 0
  %385 = vmatpush1.bf16.msra.mxu0 0
  %386 = vmatprep.subr.bf16.mxu0 0
  %387 = vmatpush1.bf16.msra.mxu0 0
  %388 = vmatprep.subr.bf16.mxu0 0
  %389 = vmatpush1.bf16.msra.mxu0 0
  %390 = vmatprep.subr.bf16.mxu0 0
  %391 = vmatpush1.bf16.msra.mxu0 0
  %392 = vmatprep.subr.bf16.mxu0 0
  %393 = vmatpush1.bf16.msra.mxu0 0
  %394 = vmatprep.subr.bf16.mxu0 0
  %395 = vmatpush1.bf16.msra.mxu0 0
  %396 = vmatprep.subr.bf16.mxu0 0
  %397 = vmatpush1.bf16.msra.mxu0 %v378
  %398 = vmatprep.subr.bf16.mxu0 0
  %399 = vmatpush1.bf16.msra.mxu0 %v377
  %400 = vmatprep.subr.bf16.mxu0 0
  %401 = vmatpush2.bf16.msra.mxu0 0
  %402 = vmatprep.subr.bf16.mxu0 0
  %403 = vmatpush2.bf16.msra.mxu0 0
  %404 = vmatprep.subr.bf16.mxu0 0
  %405 = vmatpush2.bf16.msra.mxu0 0
  %406 = vmatprep.subr.bf16.mxu0 0
  %407 = vmatpush2.bf16.msra.mxu0 0
  %408 = vmatprep.subr.bf16.mxu0 0
  %409 = vmatpush2.bf16.msra.mxu0 0
  %410 = vmatprep.subr.bf16.mxu0 0
  %411 = vmatpush2.bf16.msra.mxu0 0
  %412 = vmatprep.subr.bf16.mxu0 0
  %413 = vmatpush2.bf16.msra.mxu0 0
  %414 = vmatprep.subr.bf16.mxu0 0
  %415 = vmatpush2.bf16.msra.mxu0 0
  %416 = vmatprep.mubr.bf16.mxu0 0
  %417 = vmatmul.mubr.bf16.gmra.mxu0 %v382
  %v418 = vpop.f32.mrf.mxu0
  %v419 = vadd.f32 %v366, %v418
  %v420 = vpop.f32.mrf.mxu0
  %v421 = vpop.f32.mrf.mxu0
  %v422 = vpop.f32.mrf.mxu0
  %423 = vdwg.mxu0
  %v424 = vxor.u32 %v419, 2147483648
  %v425 = vmul.f32 %v424, 1.442695
  %v426 = vpow.pop %v425
  %v427 = vadd.f32 %v426, 1.0
  %v428 = vrcp.pop %v427
  %v429 = vmul.f32 1.0, %v428
  %v430 = vtanh.pop %v419
  %v431 = vmul.f32 %v429, %v345
  %433 = vrot.lane.b32.xlu0 %v430, 32
  %v434 = vpop.permute.xlu0 %433
  %v436 = vmul.f32 %v429, %v434
  %438 = vrot.lane.b32.xlu0 %v436, 32
  %v439 = vpop.permute.xlu0 %438
  %v441 = vadd.f32 %v431, %v439
  %v442 = vtanh.pop %v441
  %444 = vrot.lane.b32.xlu0 %v442, 32
  %v445 = vpop.permute.xlu0 %444
  %v447 = vmul.f32 %v429, %v445
  %v448 = vpack.c.bf16 %v447, %v447
  %v450 = vunpack.c.l.b16 %v448
  %v451 = vpack.c.b16 %v450, %v450
  %452 = vrot.lane.b32.xlu0 %v451, 64
  %v453 = vpop.permute.xlu0 %452
  %s455 = scalar_lea.vmem [#allocation3], 8
  %456 = vst.msk [vmem:[%s455] sm:$0xf] %vm263, %v453
  %v457 = vld [vmem:[%s2] sm:$0xf]
  %v458 = vld [vmem:[%s2 + $0x4] sm:$0xf]
  %v459 = vld [vmem:[%s2 + $0x8] sm:$0xf]
  %v460 = vld [vmem:[%s2 + $0xc] sm:$0xf]
  %s461 = scalar_lea.vmem [#allocation2], 24
  %v462 = vld [vmem:[%s461] sm:$0xff]
  %463 = vrot.lane.b32.xlu0 %v448, 64
  %v464 = vpop.permute.xlu0 %463
  %v469 = vunpack.c.l.b16 %v457
  %v470 = vunpack.c.l.b16 %v458
  %v471 = vunpack.c.l.b16 %v459
  %v472 = vunpack.c.l.b16 %v460
  %v473 = vpack.c.b16 %v470, %v469
  %v474 = vpack.c.b16 %v472, %v471
  %v478 = vsel %vm188, %v464, 0
  %480 = vmatprep.subr.bf16.mxu0 0
  %481 = vmatpush1.bf16.msra.mxu0 0
  %482 = vmatprep.subr.bf16.mxu0 0
  %483 = vmatpush1.bf16.msra.mxu0 0
  %484 = vmatprep.subr.bf16.mxu0 0
  %485 = vmatpush1.bf16.msra.mxu0 0
  %486 = vmatprep.subr.bf16.mxu0 0
  %487 = vmatpush1.bf16.msra.mxu0 0
  %488 = vmatprep.subr.bf16.mxu0 0
  %489 = vmatpush1.bf16.msra.mxu0 0
  %490 = vmatprep.subr.bf16.mxu0 0
  %491 = vmatpush1.bf16.msra.mxu0 0
  %492 = vmatprep.subr.bf16.mxu0 0
  %493 = vmatpush1.bf16.msra.mxu0 %v474
  %494 = vmatprep.subr.bf16.mxu0 0
  %495 = vmatpush1.bf16.msra.mxu0 %v473
  %496 = vmatprep.subr.bf16.mxu0 0
  %497 = vmatpush2.bf16.msra.mxu0 0
  %498 = vmatprep.subr.bf16.mxu0 0
  %499 = vmatpush2.bf16.msra.mxu0 0
  %500 = vmatprep.subr.bf16.mxu0 0
  %501 = vmatpush2.bf16.msra.mxu0 0
  %502 = vmatprep.subr.bf16.mxu0 0
  %503 = vmatpush2.bf16.msra.mxu0 0
  %504 = vmatprep.subr.bf16.mxu0 0
  %505 = vmatpush2.bf16.msra.mxu0 0
  %506 = vmatprep.subr.bf16.mxu0 0
  %507 = vmatpush2.bf16.msra.mxu0 0
  %508 = vmatprep.subr.bf16.mxu0 0
  %509 = vmatpush2.bf16.msra.mxu0 0
  %510 = vmatprep.subr.bf16.mxu0 0
  %511 = vmatpush2.bf16.msra.mxu0 0
  %512 = vmatprep.mubr.bf16.mxu0 0
  %513 = vmatmul.mubr.bf16.gmra.mxu0 %v478
  %v514 = vpop.f32.mrf.mxu0
  %v515 = vadd.f32 %v462, %v514
  %v516 = vpop.f32.mrf.mxu0
  %v517 = vpop.f32.mrf.mxu0
  %v518 = vpop.f32.mrf.mxu0
  %519 = vdwg.mxu0
  %v520 = vxor.u32 %v515, 2147483648
  %v521 = vmul.f32 %v520, 1.442695
  %v522 = vpow.pop %v521
  %v523 = vadd.f32 %v522, 1.0
  %v524 = vrcp.pop %v523
  %v525 = vmul.f32 1.0, %v524
  %v526 = vtanh.pop %v515
  %v527 = vmul.f32 %v525, %v441
  %529 = vrot.lane.b32.xlu0 %v526, 32
  %v530 = vpop.permute.xlu0 %529
  %v532 = vmul.f32 %v525, %v530
  %534 = vrot.lane.b32.xlu0 %v532, 32
  %v535 = vpop.permute.xlu0 %534
  %v537 = vadd.f32 %v527, %v535
  %v538 = vtanh.pop %v537
  %540 = vrot.lane.b32.xlu0 %v538, 32
  %v541 = vpop.permute.xlu0 %540
  %v543 = vmul.f32 %v525, %v541
  %v544 = vpack.c.bf16 %v543, %v543
  %v546 = vunpack.c.l.b16 %v544
  %v547 = vpack.c.b16 %v546, %v546
  %548 = vrot.lane.b32.xlu0 %v547, 64
  %v549 = vpop.permute.xlu0 %548
  %s551 = scalar_lea.vmem [#allocation3], 12
  %552 = vst.msk [vmem:[%s551] sm:$0xf] %vm263, %v549
  %v553 = vld [vmem:[%s2] sm:$0xf]
  %v554 = vld [vmem:[%s2 + $0x4] sm:$0xf]
  %v555 = vld [vmem:[%s2 + $0x8] sm:$0xf]
  %v556 = vld [vmem:[%s2 + $0xc] sm:$0xf]
  %s557 = scalar_lea.vmem [#allocation2], 32
  %v558 = vld [vmem:[%s557] sm:$0xff]
  %559 = vrot.lane.b32.xlu0 %v544, 64
  %v560 = vpop.permute.xlu0 %559
  %v565 = vunpack.c.l.b16 %v553
  %v566 = vunpack.c.l.b16 %v554
  %v567 = vunpack.c.l.b16 %v555
  %v568 = vunpack.c.l.b16 %v556
  %v569 = vpack.c.b16 %v566, %v565
  %v570 = vpack.c.b16 %v568, %v567
  %v574 = vsel %vm188, %v560, 0
  %576 = vmatprep.subr.bf16.mxu0 0
  %577 = vmatpush1.bf16.msra.mxu0 0
  %578 = vmatprep.subr.bf16.mxu0 0
  %579 = vmatpush1.bf16.msra.mxu0 0
  %580 = vmatprep.subr.bf16.mxu0 0
  %581 = vmatpush1.bf16.msra.mxu0 0
  %582 = vmatprep.subr.bf16.mxu0 0
  %583 = vmatpush1.bf16.msra.mxu0 0
  %584 = vmatprep.subr.bf16.mxu0 0
  %585 = vmatpush1.bf16.msra.mxu0 0
  %586 = vmatprep.subr.bf16.mxu0 0
  %587 = vmatpush1.bf16.msra.mxu0 0
  %588 = vmatprep.subr.bf16.mxu0 0
  %589 = vmatpush1.bf16.msra.mxu0 %v570
  %590 = vmatprep.subr.bf16.mxu0 0
  %591 = vmatpush1.bf16.msra.mxu0 %v569
  %592 = vmatprep.subr.bf16.mxu0 0
  %593 = vmatpush2.bf16.msra.mxu0 0
  %594 = vmatprep.subr.bf16.mxu0 0
  %595 = vmatpush2.bf16.msra.mxu0 0
  %596 = vmatprep.subr.bf16.mxu0 0
  %597 = vmatpush2.bf16.msra.mxu0 0
  %598 = vmatprep.subr.bf16.mxu0 0
  %599 = vmatpush2.bf16.msra.mxu0 0
  %600 = vmatprep.subr.bf16.mxu0 0
  %601 = vmatpush2.bf16.msra.mxu0 0
  %602 = vmatprep.subr.bf16.mxu0 0
  %603 = vmatpush2.bf16.msra.mxu0 0
  %604 = vmatprep.subr.bf16.mxu0 0
  %605 = vmatpush2.bf16.msra.mxu0 0
  %606 = vmatprep.subr.bf16.mxu0 0
  %607 = vmatpush2.bf16.msra.mxu0 0
  %608 = vmatprep.mubr.bf16.mxu0 0
  %609 = vmatmul.mubr.bf16.gmra.mxu0 %v574
  %v610 = vpop.f32.mrf.mxu0
  %v611 = vadd.f32 %v558, %v610
  %v612 = vpop.f32.mrf.mxu0
  %v613 = vpop.f32.mrf.mxu0
  %v614 = vpop.f32.mrf.mxu0
  %615 = vdwg.mxu0
  %v616 = vxor.u32 %v611, 2147483648
  %v617 = vmul.f32 %v616, 1.442695
  %v618 = vpow.pop %v617
  %v619 = vadd.f32 %v618, 1.0
  %v620 = vrcp.pop %v619
  %v621 = vmul.f32 1.0, %v620
  %v622 = vtanh.pop %v611
  %v623 = vmul.f32 %v621, %v537
  %625 = vrot.lane.b32.xlu0 %v622, 32
  %v626 = vpop.permute.xlu0 %625
  %v628 = vmul.f32 %v621, %v626
  %630 = vrot.lane.b32.xlu0 %v628, 32
  %v631 = vpop.permute.xlu0 %630
  %v633 = vadd.f32 %v623, %v631
  %v634 = vtanh.pop %v633
  %636 = vrot.lane.b32.xlu0 %v634, 32
  %v637 = vpop.permute.xlu0 %636
  %v639 = vmul.f32 %v621, %v637
  %v640 = vpack.c.bf16 %v639, %v639
  %v642 = vunpack.c.l.b16 %v640
  %v643 = vpack.c.b16 %v642, %v642
  %644 = vrot.lane.b32.xlu0 %v643, 64
  %v645 = vpop.permute.xlu0 %644
  %s647 = scalar_lea.vmem [#allocation3], 16
  %648 = vst.msk [vmem:[%s647] sm:$0xf] %vm263, %v645
  %v649 = vld [vmem:[%s2] sm:$0xf]
  %v650 = vld [vmem:[%s2 + $0x4] sm:$0xf]
  %v651 = vld [vmem:[%s2 + $0x8] sm:$0xf]
  %v652 = vld [vmem:[%s2 + $0xc] sm:$0xf]
  %s653 = scalar_lea.vmem [#allocation2], 40
  %v654 = vld [vmem:[%s653] sm:$0xff]
  %655 = vrot.lane.b32.xlu0 %v640, 64
  %v656 = vpop.permute.xlu0 %655
  %v661 = vunpack.c.l.b16 %v649
  %v662 = vunpack.c.l.b16 %v650
  %v663 = vunpack.c.l.b16 %v651
  %v664 = vunpack.c.l.b16 %v652
  %v665 = vpack.c.b16 %v662, %v661
  %v666 = vpack.c.b16 %v664, %v663
  %v670 = vsel %vm188, %v656, 0
  %672 = vmatprep.subr.bf16.mxu0 0
  %673 = vmatpush1.bf16.msra.mxu0 0
  %674 = vmatprep.subr.bf16.mxu0 0
  %675 = vmatpush1.bf16.msra.mxu0 0
  %676 = vmatprep.subr.bf16.mxu0 0
  %677 = vmatpush1.bf16.msra.mxu0 0
  %678 = vmatprep.subr.bf16.mxu0 0
  %679 = vmatpush1.bf16.msra.mxu0 0
  %680 = vmatprep.subr.bf16.mxu0 0
  %681 = vmatpush1.bf16.msra.mxu0 0
  %682 = vmatprep.subr.bf16.mxu0 0
  %683 = vmatpush1.bf16.msra.mxu0 0
  %684 = vmatprep.subr.bf16.mxu0 0
  %685 = vmatpush1.bf16.msra.mxu0 %v666
  %686 = vmatprep.subr.bf16.mxu0 0
  %687 = vmatpush1.bf16.msra.mxu0 %v665
  %688 = vmatprep.subr.bf16.mxu0 0
  %689 = vmatpush2.bf16.msra.mxu0 0
  %690 = vmatprep.subr.bf16.mxu0 0
  %691 = vmatpush2.bf16.msra.mxu0 0
  %692 = vmatprep.subr.bf16.mxu0 0
  %693 = vmatpush2.bf16.msra.mxu0 0
  %694 = vmatprep.subr.bf16.mxu0 0
  %695 = vmatpush2.bf16.msra.mxu0 0
  %696 = vmatprep.subr.bf16.mxu0 0
  %697 = vmatpush2.bf16.msra.mxu0 0
  %698 = vmatprep.subr.bf16.mxu0 0
  %699 = vmatpush2.bf16.msra.mxu0 0
  %700 = vmatprep.subr.bf16.mxu0 0
  %701 = vmatpush2.bf16.msra.mxu0 0
  %702 = vmatprep.subr.bf16.mxu0 0
  %703 = vmatpush2.bf16.msra.mxu0 0
  %704 = vmatprep.mubr.bf16.mxu0 0
  %705 = vmatmul.mubr.bf16.gmra.mxu0 %v670
  %v706 = vpop.f32.mrf.mxu0
  %v707 = vadd.f32 %v654, %v706
  %v708 = vpop.f32.mrf.mxu0
  %v709 = vpop.f32.mrf.mxu0
  %v710 = vpop.f32.mrf.mxu0
  %711 = vdwg.mxu0
  %v712 = vxor.u32 %v707, 2147483648
  %v713 = vmul.f32 %v712, 1.442695
  %v714 = vpow.pop %v713
  %v715 = vadd.f32 %v714, 1.0
  %v716 = vrcp.pop %v715
  %v717 = vmul.f32 1.0, %v716
  %v718 = vtanh.pop %v707
  %v719 = vmul.f32 %v717, %v633
  %721 = vrot.lane.b32.xlu0 %v718, 32
  %v722 = vpop.permute.xlu0 %721
  %v724 = vmul.f32 %v717, %v722
  %726 = vrot.lane.b32.xlu0 %v724, 32
  %v727 = vpop.permute.xlu0 %726
  %v729 = vadd.f32 %v719, %v727
  %v730 = vtanh.pop %v729
  %732 = vrot.lane.b32.xlu0 %v730, 32
  %v733 = vpop.permute.xlu0 %732
  %v735 = vmul.f32 %v717, %v733
  %v736 = vpack.c.bf16 %v735, %v735
  %v738 = vunpack.c.l.b16 %v736
  %v739 = vpack.c.b16 %v738, %v738
  %740 = vrot.lane.b32.xlu0 %v739, 64
  %v741 = vpop.permute.xlu0 %740
  %s743 = scalar_lea.vmem [#allocation3], 20
  %744 = vst.msk [vmem:[%s743] sm:$0xf] %vm263, %v741
  %v745 = vld [vmem:[%s2] sm:$0xf]
  %v746 = vld [vmem:[%s2 + $0x4] sm:$0xf]
  %v747 = vld [vmem:[%s2 + $0x8] sm:$0xf]
  %v748 = vld [vmem:[%s2 + $0xc] sm:$0xf]
  %s749 = scalar_lea.vmem [#allocation2], 48
  %v750 = vld [vmem:[%s749] sm:$0xff]
  %751 = vrot.lane.b32.xlu0 %v736, 64
  %v752 = vpop.permute.xlu0 %751
  %v757 = vunpack.c.l.b16 %v745
  %v758 = vunpack.c.l.b16 %v746
  %v759 = vunpack.c.l.b16 %v747
  %v760 = vunpack.c.l.b16 %v748
  %v761 = vpack.c.b16 %v758, %v757
  %v762 = vpack.c.b16 %v760, %v759
  %v766 = vsel %vm188, %v752, 0
  %768 = vmatprep.subr.bf16.mxu0 0
  %769 = vmatpush1.bf16.msra.mxu0 0
  %770 = vmatprep.subr.bf16.mxu0 0
  %771 = vmatpush1.bf16.msra.mxu0 0
  %772 = vmatprep.subr.bf16.mxu0 0
  %773 = vmatpush1.bf16.msra.mxu0 0
  %774 = vmatprep.subr.bf16.mxu0 0
  %775 = vmatpush1.bf16.msra.mxu0 0
  %776 = vmatprep.subr.bf16.mxu0 0
  %777 = vmatpush1.bf16.msra.mxu0 0
  %778 = vmatprep.subr.bf16.mxu0 0
  %779 = vmatpush1.bf16.msra.mxu0 0
  %780 = vmatprep.subr.bf16.mxu0 0
  %781 = vmatpush1.bf16.msra.mxu0 %v762
  %782 = vmatprep.subr.bf16.mxu0 0
  %783 = vmatpush1.bf16.msra.mxu0 %v761
  %784 = vmatprep.subr.bf16.mxu0 0
  %785 = vmatpush2.bf16.msra.mxu0 0
  %786 = vmatprep.subr.bf16.mxu0 0
  %787 = vmatpush2.bf16.msra.mxu0 0
  %788 = vmatprep.subr.bf16.mxu0 0
  %789 = vmatpush2.bf16.msra.mxu0 0
  %790 = vmatprep.subr.bf16.mxu0 0
  %791 = vmatpush2.bf16.msra.mxu0 0
  %792 = vmatprep.subr.bf16.mxu0 0
  %793 = vmatpush2.bf16.msra.mxu0 0
  %794 = vmatprep.subr.bf16.mxu0 0
  %795 = vmatpush2.bf16.msra.mxu0 0
  %796 = vmatprep.subr.bf16.mxu0 0
  %797 = vmatpush2.bf16.msra.mxu0 0
  %798 = vmatprep.subr.bf16.mxu0 0
  %799 = vmatpush2.bf16.msra.mxu0 0
  %800 = vmatprep.mubr.bf16.mxu0 0
  %801 = vmatmul.mubr.bf16.gmra.mxu0 %v766
  %v802 = vpop.f32.mrf.mxu0
  %v803 = vadd.f32 %v750, %v802
  %v804 = vpop.f32.mrf.mxu0
  %v805 = vpop.f32.mrf.mxu0
  %v806 = vpop.f32.mrf.mxu0
  %807 = vdwg.mxu0
  %v808 = vxor.u32 %v803, 2147483648
  %v809 = vmul.f32 %v808, 1.442695
  %v810 = vpow.pop %v809
  %v811 = vadd.f32 %v810, 1.0
  %v812 = vrcp.pop %v811
  %v813 = vmul.f32 1.0, %v812
  %v814 = vtanh.pop %v803
  %v815 = vmul.f32 %v813, %v729
  %817 = vrot.lane.b32.xlu0 %v814, 32
  %v818 = vpop.permute.xlu0 %817
  %v820 = vmul.f32 %v813, %v818
  %822 = vrot.lane.b32.xlu0 %v820, 32
  %v823 = vpop.permute.xlu0 %822
  %v825 = vadd.f32 %v815, %v823
  %v826 = vtanh.pop %v825
  %828 = vrot.lane.b32.xlu0 %v826, 32
  %v829 = vpop.permute.xlu0 %828
  %v831 = vmul.f32 %v813, %v829
  %v832 = vpack.c.bf16 %v831, %v831
  %v834 = vunpack.c.l.b16 %v832
  %v835 = vpack.c.b16 %v834, %v834
  %836 = vrot.lane.b32.xlu0 %v835, 64
  %v837 = vpop.permute.xlu0 %836
  %s839 = scalar_lea.vmem [#allocation3], 24
  %840 = vst.msk [vmem:[%s839] sm:$0xf] %vm263, %v837
  %v841 = vld [vmem:[%s2] sm:$0xf]
  %v842 = vld [vmem:[%s2 + $0x4] sm:$0xf]
  %v843 = vld [vmem:[%s2 + $0x8] sm:$0xf]
  %v844 = vld [vmem:[%s2 + $0xc] sm:$0xf]
  %s845 = scalar_lea.vmem [#allocation2], 56
  %v846 = vld [vmem:[%s845] sm:$0xff]
  %847 = vrot.lane.b32.xlu0 %v832, 64
  %v848 = vpop.permute.xlu0 %847
  %v853 = vunpack.c.l.b16 %v841
  %v854 = vunpack.c.l.b16 %v842
  %v855 = vunpack.c.l.b16 %v843
  %v856 = vunpack.c.l.b16 %v844
  %v857 = vpack.c.b16 %v854, %v853
  %v858 = vpack.c.b16 %v856, %v855
  %v862 = vsel %vm188, %v848, 0
  %864 = vmatprep.subr.bf16.mxu0 0
  %865 = vmatpush1.bf16.msra.mxu0 0
  %866 = vmatprep.subr.bf16.mxu0 0
  %867 = vmatpush1.bf16.msra.mxu0 0
  %868 = vmatprep.subr.bf16.mxu0 0
  %869 = vmatpush1.bf16.msra.mxu0 0
  %870 = vmatprep.subr.bf16.mxu0 0
  %871 = vmatpush1.bf16.msra.mxu0 0
  %872 = vmatprep.subr.bf16.mxu0 0
  %873 = vmatpush1.bf16.msra.mxu0 0
  %874 = vmatprep.subr.bf16.mxu0 0
  %875 = vmatpush1.bf16.msra.mxu0 0
  %876 = vmatprep.subr.bf16.mxu0 0
  %877 = vmatpush1.bf16.msra.mxu0 %v858
  %878 = vmatprep.subr.bf16.mxu0 0
  %879 = vmatpush1.bf16.msra.mxu0 %v857
  %880 = vmatprep.subr.bf16.mxu0 0
  %881 = vmatpush2.bf16.msra.mxu0 0
  %882 = vmatprep.subr.bf16.mxu0 0
  %883 = vmatpush2.bf16.msra.mxu0 0
  %884 = vmatprep.subr.bf16.mxu0 0
  %885 = vmatpush2.bf16.msra.mxu0 0
  %886 = vmatprep.subr.bf16.mxu0 0
  %887 = vmatpush2.bf16.msra.mxu0 0
  %888 = vmatprep.subr.bf16.mxu0 0
  %889 = vmatpush2.bf16.msra.mxu0 0
  %890 = vmatprep.subr.bf16.mxu0 0
  %891 = vmatpush2.bf16.msra.mxu0 0
  %892 = vmatprep.subr.bf16.mxu0 0
  %893 = vmatpush2.bf16.msra.mxu0 0
  %894 = vmatprep.subr.bf16.mxu0 0
  %895 = vmatpush2.bf16.msra.mxu0 0
  %896 = vmatprep.mubr.bf16.mxu0 0
  %897 = vmatmul.mubr.bf16.gmra.mxu0 %v862
  %v898 = vpop.f32.mrf.mxu0
  %v899 = vadd.f32 %v846, %v898
  %v900 = vpop.f32.mrf.mxu0
  %v901 = vpop.f32.mrf.mxu0
  %v902 = vpop.f32.mrf.mxu0
  %903 = vdwg.mxu0
  %v904 = vxor.u32 %v899, 2147483648
  %v905 = vmul.f32 %v904, 1.442695
  %v906 = vpow.pop %v905
  %v907 = vadd.f32 %v906, 1.0
  %v908 = vrcp.pop %v907
  %v909 = vmul.f32 1.0, %v908
  %v910 = vtanh.pop %v899
  %v911 = vmul.f32 %v909, %v825
  %913 = vrot.lane.b32.xlu0 %v910, 32
  %v914 = vpop.permute.xlu0 %913
  %v916 = vmul.f32 %v909, %v914
  %918 = vrot.lane.b32.xlu0 %v916, 32
  %v919 = vpop.permute.xlu0 %918
  %v921 = vadd.f32 %v911, %v919
  %v922 = vtanh.pop %v921
  %924 = vrot.lane.b32.xlu0 %v922, 32
  %v925 = vpop.permute.xlu0 %924
  %v927 = vmul.f32 %v909, %v925
  %v928 = vpack.c.bf16 %v927, %v927
  %v930 = vunpack.c.l.b16 %v928
  %v931 = vpack.c.b16 %v930, %v930
  %932 = vrot.lane.b32.xlu0 %v931, 64
  %v933 = vpop.permute.xlu0 %932
  %s935 = scalar_lea.vmem [#allocation3], 28
  %936 = vst.msk [vmem:[%s935] sm:$0xf] %vm263, %v933
  %v937 = vld [vmem:[#allocation3] sm:$0xf]
  %v938 = vld [vmem:[#allocation3 + $0x4] sm:$0xf]
  %v939 = vld [vmem:[#allocation3 + $0x8] sm:$0xf]
  %v940 = vld [vmem:[#allocation3 + $0xc] sm:$0xf]
  %v941 = vld [vmem:[#allocation3 + $0x10] sm:$0xf]
  %v942 = vld [vmem:[#allocation3 + $0x14] sm:$0xf]
  %v943 = vld [vmem:[#allocation3 + $0x18] sm:$0xf]
  %v944 = vld [vmem:[#allocation3 + $0x1c] sm:$0xf]
  %v945 = vld [vmem:[%s4] sm:$0xf]
  %v946 = vld [vmem:[%s4 + $0x4] sm:$0xf]
  %v947 = vld [vmem:[%s4 + $0x8] sm:$0xf]
  %v948 = vld [vmem:[%s4 + $0xc] sm:$0xf]
  %v949 = vld [vmem:[%s6] sm:$0x1]
  %v951 = vlaneseq
  %v952 = vshrl.u32 %v951, 7
  %v953 = vsub.s32 0, %v952
  %v954 = vrot.slane %v949, %v953
  %v964 = vunpack.c.l.b16 %v937
  %v965 = vunpack.c.l.b16 %v938
  %v966 = vunpack.c.l.b16 %v939
  %v967 = vunpack.c.l.b16 %v940
  %v968 = vunpack.c.l.b16 %v941
  %v969 = vunpack.c.l.b16 %v942
  %v970 = vunpack.c.l.b16 %v943
  %v971 = vunpack.c.l.b16 %v944
  %v972 = vpack.c.b16 %v965, %v964
  %v973 = vpack.c.b16 %v967, %v966
  %v974 = vpack.c.b16 %v969, %v968
  %v975 = vpack.c.b16 %v971, %v970
  %v980 = vunpack.c.l.b16 %v945
  %v981 = vunpack.c.l.b16 %v946
  %v982 = vunpack.c.l.b16 %v947
  %v983 = vunpack.c.l.b16 %v948
  %v984 = vpack.c.b16 %v981, %v980
  %v985 = vpack.c.b16 %v983, %v982
  %v989 = vsel %vm188, %v972, 0
  %v992 = vsel %vm188, %v973, 0
  %v995 = vsel %vm188, %v974, 0
  %v998 = vsel %vm188, %v975, 0
  %1000 = vmatprep.subr.bf16.mxu0 0
  %1001 = vmatpush1.bf16.msra.mxu0 0
  %1002 = vmatprep.subr.bf16.mxu0 0
  %1003 = vmatpush1.bf16.msra.mxu0 0
  %1004 = vmatprep.subr.bf16.mxu0 0
  %1005 = vmatpush1.bf16.msra.mxu0 0
  %1006 = vmatprep.subr.bf16.mxu0 0
  %1007 = vmatpush1.bf16.msra.mxu0 0
  %1008 = vmatprep.subr.bf16.mxu0 0
  %1009 = vmatpush1.bf16.msra.mxu0 0
  %1010 = vmatprep.subr.bf16.mxu0 0
  %1011 = vmatpush1.bf16.msra.mxu0 0
  %1012 = vmatprep.subr.bf16.mxu0 0
  %1013 = vmatpush1.bf16.msra.mxu0 %v985
  %1014 = vmatprep.subr.bf16.mxu0 0
  %1015 = vmatpush1.bf16.msra.mxu0 %v984
  %1016 = vmatprep.subr.bf16.mxu0 0
  %1017 = vmatpush2.bf16.msra.mxu0 0
  %1018 = vmatprep.subr.bf16.mxu0 0
  %1019 = vmatpush2.bf16.msra.mxu0 0
  %1020 = vmatprep.subr.bf16.mxu0 0
  %1021 = vmatpush2.bf16.msra.mxu0 0
  %1022 = vmatprep.subr.bf16.mxu0 0
  %1023 = vmatpush2.bf16.msra.mxu0 0
  %1024 = vmatprep.subr.bf16.mxu0 0
  %1025 = vmatpush2.bf16.msra.mxu0 0
  %1026 = vmatprep.subr.bf16.mxu0 0
  %1027 = vmatpush2.bf16.msra.mxu0 0
  %1028 = vmatprep.subr.bf16.mxu0 0
  %1029 = vmatpush2.bf16.msra.mxu0 0
  %1030 = vmatprep.subr.bf16.mxu0 0
  %1031 = vmatpush2.bf16.msra.mxu0 0
  %1032 = vmatprep.mubr.bf16.mxu0 0
  %1033 = vmatmul.mubr.bf16.gmra.mxu0 %v989
  %v1034 = vpop.f32.mrf.mxu0
  %v1035 = vadd.f32 %v954, %v1034
  %v1036 = vpop.f32.mrf.mxu0
  %v1037 = vpop.f32.mrf.mxu0
  %v1038 = vadd.f32 %v954, %v1037
  %v1039 = vpop.f32.mrf.mxu0
  %1040 = vmatprep.mubr.bf16.mxu0 0
  %1041 = vmatmul.mubr.bf16.gmra.mxu0 %v992
  %v1042 = vpop.f32.mrf.mxu0
  %v1043 = vadd.f32 %v954, %v1042
  %v1044 = vpop.f32.mrf.mxu0
  %v1045 = vpop.f32.mrf.mxu0
  %v1046 = vadd.f32 %v954, %v1045
  %v1047 = vpop.f32.mrf.mxu0
  %1048 = vmatprep.mubr.bf16.mxu0 0
  %1049 = vmatmul.mubr.bf16.gmra.mxu0 %v995
  %v1050 = vpop.f32.mrf.mxu0
  %v1051 = vadd.f32 %v954, %v1050
  %v1052 = vpop.f32.mrf.mxu0
  %v1053 = vpop.f32.mrf.mxu0
  %v1054 = vadd.f32 %v954, %v1053
  %v1055 = vpop.f32.mrf.mxu0
  %1056 = vmatprep.mubr.bf16.mxu0 0
  %1057 = vmatmul.mubr.bf16.gmra.mxu0 %v998
  %v1058 = vpop.f32.mrf.mxu0
  %v1059 = vadd.f32 %v954, %v1058
  %v1060 = vpop.f32.mrf.mxu0
  %v1061 = vpop.f32.mrf.mxu0
  %v1062 = vadd.f32 %v954, %v1061
  %v1063 = vpop.f32.mrf.mxu0
  %1064 = vdwg.mxu0
  %1065 = vst [vmem:[#allocation2] sm:$0xff] %v1035
  %1066 = vst [vmem:[#allocation2 + $0x8] sm:$0xff] %v1038
  %1067 = vst [vmem:[#allocation2 + $0x10] sm:$0xff] %v1043
  %1068 = vst [vmem:[#allocation2 + $0x18] sm:$0xff] %v1046
  %1069 = vst [vmem:[#allocation2 + $0x20] sm:$0xff] %v1051
  %1070 = vst [vmem:[#allocation2 + $0x28] sm:$0xff] %v1054
  %1071 = vst [vmem:[#allocation2 + $0x30] sm:$0xff] %v1059
  %1072 = vst [vmem:[#allocation2 + $0x38] sm:$0xff] %v1062
  %v1073 = vld [vmem:[%s5] sm:$0xf]
  %v1074 = vld [vmem:[%s5 + $0x4] sm:$0xf]
  %v1075 = vld [vmem:[%s5 + $0x8] sm:$0xf]
  %v1076 = vld [vmem:[%s5 + $0xc] sm:$0xf]
  %v1077 = vld [vmem:[#allocation2] sm:$0xff]
  %v1082 = vunpack.c.l.b16 %v1073
  %v1083 = vunpack.c.l.b16 %v1074
  %v1084 = vunpack.c.l.b16 %v1075
  %v1085 = vunpack.c.l.b16 %v1076
  %v1086 = vpack.c.b16 %v1083, %v1082
  %v1087 = vpack.c.b16 %v1085, %v1084
  %1090 = vmatprep.subr.bf16.mxu0 0
  %1091 = vmatpush1.bf16.msra.mxu0 0
  %1092 = vmatprep.subr.bf16.mxu0 0
  %1093 = vmatpush1.bf16.msra.mxu0 0
  %1094 = vmatprep.subr.bf16.mxu0 0
  %1095 = vmatpush1.bf16.msra.mxu0 0
  %1096 = vmatprep.subr.bf16.mxu0 0
  %1097 = vmatpush1.bf16.msra.mxu0 0
  %1098 = vmatprep.subr.bf16.mxu0 0
  %1099 = vmatpush1.bf16.msra.mxu0 0
  %1100 = vmatprep.subr.bf16.mxu0 0
  %1101 = vmatpush1.bf16.msra.mxu0 0
  %1102 = vmatprep.subr.bf16.mxu0 0
  %1103 = vmatpush1.bf16.msra.mxu0 %v1087
  %1104 = vmatprep.subr.bf16.mxu0 0
  %1105 = vmatpush1.bf16.msra.mxu0 %v1086
  %1106 = vmatprep.subr.bf16.mxu0 0
  %1107 = vmatpush2.bf16.msra.mxu0 0
  %1108 = vmatprep.subr.bf16.mxu0 0
  %1109 = vmatpush2.bf16.msra.mxu0 0
  %1110 = vmatprep.subr.bf16.mxu0 0
  %1111 = vmatpush2.bf16.msra.mxu0 0
  %1112 = vmatprep.subr.bf16.mxu0 0
  %1113 = vmatpush2.bf16.msra.mxu0 0
  %1114 = vmatprep.subr.bf16.mxu0 0
  %1115 = vmatpush2.bf16.msra.mxu0 0
  %1116 = vmatprep.subr.bf16.mxu0 0
  %1117 = vmatpush2.bf16.msra.mxu0 0
  %1118 = vmatprep.subr.bf16.mxu0 0
  %1119 = vmatpush2.bf16.msra.mxu0 0
  %1120 = vmatprep.subr.bf16.mxu0 0
  %1121 = vmatpush2.bf16.msra.mxu0 0
  %1122 = vmatprep.mubr.bf16.mxu0 0
  %1123 = vmatmul.mubr.bf16.gmra.mxu0 %v190
  %v1124 = vpop.f32.mrf.mxu0
  %v1125 = vadd.f32 %v1077, %v1124
  %v1126 = vpop.f32.mrf.mxu0
  %v1127 = vpop.f32.mrf.mxu0
  %v1128 = vpop.f32.mrf.mxu0
  %1129 = vdwg.mxu0
  %v1130 = vxor.u32 %v1125, 2147483648
  %v1131 = vmul.f32 %v1130, 1.442695
  %v1132 = vpow.pop %v1131
  %v1133 = vadd.f32 %v1132, 1.0
  %v1134 = vrcp.pop %v1133
  %v1135 = vmul.f32 1.0, %v1134
  %v1136 = vtanh.pop %v1125
  %v1137 = vmul.f32 %v1135, 0.0
  %1139 = vrot.lane.b32.xlu0 %v1136, 32
  %v1140 = vpop.permute.xlu0 %1139
  %v1142 = vmul.f32 %v1135, %v1140
  %1144 = vrot.lane.b32.xlu0 %v1142, 32
  %v1145 = vpop.permute.xlu0 %1144
  %v1147 = vadd.f32 %v1137, %v1145
  %v1148 = vtanh.pop %v1147
  %1150 = vrot.lane.b32.xlu0 %v1148, 32
  %v1151 = vpop.permute.xlu0 %1150
  %v1153 = vmul.f32 %v1135, %v1151
  %v1154 = vpack.c.bf16 %v1153, %v1153
  %v1155 = vld [vmem:[%s269] sm:$0xff]
  %1157 = vrot.lane.b32.xlu0 %v1154, 64
  %v1158 = vpop.permute.xlu0 %1157
  %v1160 = vsel %vm188, %v1158, 0
  %1162 = vmatprep.subr.bf16.mxu0 0
  %1163 = vmatpush1.bf16.msra.mxu0 0
  %1164 = vmatprep.subr.bf16.mxu0 0
  %1165 = vmatpush1.bf16.msra.mxu0 0
  %1166 = vmatprep.subr.bf16.mxu0 0
  %1167 = vmatpush1.bf16.msra.mxu0 0
  %1168 = vmatprep.subr.bf16.mxu0 0
  %1169 = vmatpush1.bf16.msra.mxu0 0
  %1170 = vmatprep.subr.bf16.mxu0 0
  %1171 = vmatpush1.bf16.msra.mxu0 0
  %1172 = vmatprep.subr.bf16.mxu0 0
  %1173 = vmatpush1.bf16.msra.mxu0 0
  %1174 = vmatprep.subr.bf16.mxu0 0
  %1175 = vmatpush1.bf16.msra.mxu0 %v1087
  %1176 = vmatprep.subr.bf16.mxu0 0
  %1177 = vmatpush1.bf16.msra.mxu0 %v1086
  %1178 = vmatprep.subr.bf16.mxu0 0
  %1179 = vmatpush2.bf16.msra.mxu0 0
  %1180 = vmatprep.subr.bf16.mxu0 0
  %1181 = vmatpush2.bf16.msra.mxu0 0
  %1182 = vmatprep.subr.bf16.mxu0 0
  %1183 = vmatpush2.bf16.msra.mxu0 0
  %1184 = vmatprep.subr.bf16.mxu0 0
  %1185 = vmatpush2.bf16.msra.mxu0 0
  %1186 = vmatprep.subr.bf16.mxu0 0
  %1187 = vmatpush2.bf16.msra.mxu0 0
  %1188 = vmatprep.subr.bf16.mxu0 0
  %1189 = vmatpush2.bf16.msra.mxu0 0
  %1190 = vmatprep.subr.bf16.mxu0 0
  %1191 = vmatpush2.bf16.msra.mxu0 0
  %1192 = vmatprep.subr.bf16.mxu0 0
  %1193 = vmatpush2.bf16.msra.mxu0 0
  %1194 = vmatprep.mubr.bf16.mxu0 0
  %1195 = vmatmul.mubr.bf16.gmra.mxu0 %v1160
  %v1196 = vpop.f32.mrf.mxu0
  %v1197 = vadd.f32 %v1155, %v1196
  %v1198 = vpop.f32.mrf.mxu0
  %v1199 = vpop.f32.mrf.mxu0
  %v1200 = vpop.f32.mrf.mxu0
  %1201 = vdwg.mxu0
  %v1202 = vxor.u32 %v1197, 2147483648
  %v1203 = vmul.f32 %v1202, 1.442695
  %v1204 = vpow.pop %v1203
  %v1205 = vadd.f32 %v1204, 1.0
  %v1206 = vrcp.pop %v1205
  %v1207 = vmul.f32 1.0, %v1206
  %v1208 = vtanh.pop %v1197
  %v1209 = vmul.f32 %v1207, %v1147
  %1211 = vrot.lane.b32.xlu0 %v1208, 32
  %v1212 = vpop.permute.xlu0 %1211
  %v1214 = vmul.f32 %v1207, %v1212
  %1216 = vrot.lane.b32.xlu0 %v1214, 32
  %v1217 = vpop.permute.xlu0 %1216
  %v1219 = vadd.f32 %v1209, %v1217
  %v1220 = vtanh.pop %v1219
  %1222 = vrot.lane.b32.xlu0 %v1220, 32
  %v1223 = vpop.permute.xlu0 %1222
  %v1225 = vmul.f32 %v1207, %v1223
  %v1226 = vpack.c.bf16 %v1225, %v1225
  %v1227 = vld [vmem:[%s365] sm:$0xff]
  %1229 = vrot.lane.b32.xlu0 %v1226, 64
  %v1230 = vpop.permute.xlu0 %1229
  %v1232 = vsel %vm188, %v1230, 0
  %1234 = vmatprep.subr.bf16.mxu0 0
  %1235 = vmatpush1.bf16.msra.mxu0 0
  %1236 = vmatprep.subr.bf16.mxu0 0
  %1237 = vmatpush1.bf16.msra.mxu0 0
  %1238 = vmatprep.subr.bf16.mxu0 0
  %1239 = vmatpush1.bf16.msra.mxu0 0
  %1240 = vmatprep.subr.bf16.mxu0 0
  %1241 = vmatpush1.bf16.msra.mxu0 0
  %1242 = vmatprep.subr.bf16.mxu0 0
  %1243 = vmatpush1.bf16.msra.mxu0 0
  %1244 = vmatprep.subr.bf16.mxu0 0
  %1245 = vmatpush1.bf16.msra.mxu0 0
  %1246 = vmatprep.subr.bf16.mxu0 0
  %1247 = vmatpush1.bf16.msra.mxu0 %v1087
  %1248 = vmatprep.subr.bf16.mxu0 0
  %1249 = vmatpush1.bf16.msra.mxu0 %v1086
  %1250 = vmatprep.subr.bf16.mxu0 0
  %1251 = vmatpush2.bf16.msra.mxu0 0
  %1252 = vmatprep.subr.bf16.mxu0 0
  %1253 = vmatpush2.bf16.msra.mxu0 0
  %1254 = vmatprep.subr.bf16.mxu0 0
  %1255 = vmatpush2.bf16.msra.mxu0 0
  %1256 = vmatprep.subr.bf16.mxu0 0
  %1257 = vmatpush2.bf16.msra.mxu0 0
  %1258 = vmatprep.subr.bf16.mxu0 0
  %1259 = vmatpush2.bf16.msra.mxu0 0
  %1260 = vmatprep.subr.bf16.mxu0 0
  %1261 = vmatpush2.bf16.msra.mxu0 0
  %1262 = vmatprep.subr.bf16.mxu0 0
  %1263 = vmatpush2.bf16.msra.mxu0 0
  %1264 = vmatprep.subr.bf16.mxu0 0
  %1265 = vmatpush2.bf16.msra.mxu0 0
  %1266 = vmatprep.mubr.bf16.mxu0 0
  %1267 = vmatmul.mubr.bf16.gmra.mxu0 %v1232
  %v1268 = vpop.f32.mrf.mxu0
  %v1269 = vadd.f32 %v1227, %v1268
  %v1270 = vpop.f32.mrf.mxu0
  %v1271 = vpop.f32.mrf.mxu0
  %v1272 = vpop.f32.mrf.mxu0
  %1273 = vdwg.mxu0
  %v1274 = vxor.u32 %v1269, 2147483648
  %v1275 = vmul.f32 %v1274, 1.442695
  %v1276 = vpow.pop %v1275
  %v1277 = vadd.f32 %v1276, 1.0
  %v1278 = vrcp.pop %v1277
  %v1279 = vmul.f32 1.0, %v1278
  %v1280 = vtanh.pop %v1269
  %v1281 = vmul.f32 %v1279, %v1219
  %1283 = vrot.lane.b32.xlu0 %v1280, 32
  %v1284 = vpop.permute.xlu0 %1283
  %v1286 = vmul.f32 %v1279, %v1284
  %1288 = vrot.lane.b32.xlu0 %v1286, 32
  %v1289 = vpop.permute.xlu0 %1288
  %v1291 = vadd.f32 %v1281, %v1289
  %v1292 = vtanh.pop %v1291
  %1294 = vrot.lane.b32.xlu0 %v1292, 32
  %v1295 = vpop.permute.xlu0 %1294
  %v1297 = vmul.f32 %v1279, %v1295
  %v1298 = vpack.c.bf16 %v1297, %v1297
  %v1299 = vld [vmem:[%s461] sm:$0xff]
  %1301 = vrot.lane.b32.xlu0 %v1298, 64
  %v1302 = vpop.permute.xlu0 %1301
  %v1304 = vsel %vm188, %v1302, 0
  %1306 = vmatprep.subr.bf16.mxu0 0
  %1307 = vmatpush1.bf16.msra.mxu0 0
  %1308 = vmatprep.subr.bf16.mxu0 0
  %1309 = vmatpush1.bf16.msra.mxu0 0
  %1310 = vmatprep.subr.bf16.mxu0 0
  %1311 = vmatpush1.bf16.msra.mxu0 0
  %1312 = vmatprep.subr.bf16.mxu0 0
  %1313 = vmatpush1.bf16.msra.mxu0 0
  %1314 = vmatprep.subr.bf16.mxu0 0
  %1315 = vmatpush1.bf16.msra.mxu0 0
  %1316 = vmatprep.subr.bf16.mxu0 0
  %1317 = vmatpush1.bf16.msra.mxu0 0
  %1318 = vmatprep.subr.bf16.mxu0 0
  %1319 = vmatpush1.bf16.msra.mxu0 %v1087
  %1320 = vmatprep.subr.bf16.mxu0 0
  %1321 = vmatpush1.bf16.msra.mxu0 %v1086
  %1322 = vmatprep.subr.bf16.mxu0 0
  %1323 = vmatpush2.bf16.msra.mxu0 0
  %1324 = vmatprep.subr.bf16.mxu0 0
  %1325 = vmatpush2.bf16.msra.mxu0 0
  %1326 = vmatprep.subr.bf16.mxu0 0
  %1327 = vmatpush2.bf16.msra.mxu0 0
  %1328 = vmatprep.subr.bf16.mxu0 0
  %1329 = vmatpush2.bf16.msra.mxu0 0
  %1330 = vmatprep.subr.bf16.mxu0 0
  %1331 = vmatpush2.bf16.msra.mxu0 0
  %1332 = vmatprep.subr.bf16.mxu0 0
  %1333 = vmatpush2.bf16.msra.mxu0 0
  %1334 = vmatprep.subr.bf16.mxu0 0
  %1335 = vmatpush2.bf16.msra.mxu0 0
  %1336 = vmatprep.subr.bf16.mxu0 0
  %1337 = vmatpush2.bf16.msra.mxu0 0
  %1338 = vmatprep.mubr.bf16.mxu0 0
  %1339 = vmatmul.mubr.bf16.gmra.mxu0 %v1304
  %v1340 = vpop.f32.mrf.mxu0
  %v1341 = vadd.f32 %v1299, %v1340
  %v1342 = vpop.f32.mrf.mxu0
  %v1343 = vpop.f32.mrf.mxu0
  %v1344 = vpop.f32.mrf.mxu0
  %1345 = vdwg.mxu0
  %v1346 = vxor.u32 %v1341, 2147483648
  %v1347 = vmul.f32 %v1346, 1.442695
  %v1348 = vpow.pop %v1347
  %v1349 = vadd.f32 %v1348, 1.0
  %v1350 = vrcp.pop %v1349
  %v1351 = vmul.f32 1.0, %v1350
  %v1352 = vtanh.pop %v1341
  %v1353 = vmul.f32 %v1351, %v1291
  %1355 = vrot.lane.b32.xlu0 %v1352, 32
  %v1356 = vpop.permute.xlu0 %1355
  %v1358 = vmul.f32 %v1351, %v1356
  %1360 = vrot.lane.b32.xlu0 %v1358, 32
  %v1361 = vpop.permute.xlu0 %1360
  %v1363 = vadd.f32 %v1353, %v1361
  %v1364 = vtanh.pop %v1363
  %1366 = vrot.lane.b32.xlu0 %v1364, 32
  %v1367 = vpop.permute.xlu0 %1366
  %v1369 = vmul.f32 %v1351, %v1367
  %v1370 = vpack.c.bf16 %v1369, %v1369
  %v1371 = vld [vmem:[%s557] sm:$0xff]
  %1373 = vrot.lane.b32.xlu0 %v1370, 64
  %v1374 = vpop.permute.xlu0 %1373
  %v1376 = vsel %vm188, %v1374, 0
  %1378 = vmatprep.subr.bf16.mxu0 0
  %1379 = vmatpush1.bf16.msra.mxu0 0
  %1380 = vmatprep.subr.bf16.mxu0 0
  %1381 = vmatpush1.bf16.msra.mxu0 0
  %1382 = vmatprep.subr.bf16.mxu0 0
  %1383 = vmatpush1.bf16.msra.mxu0 0
  %1384 = vmatprep.subr.bf16.mxu0 0
  %1385 = vmatpush1.bf16.msra.mxu0 0
  %1386 = vmatprep.subr.bf16.mxu0 0
  %1387 = vmatpush1.bf16.msra.mxu0 0
  %1388 = vmatprep.subr.bf16.mxu0 0
  %1389 = vmatpush1.bf16.msra.mxu0 0
  %1390 = vmatprep.subr.bf16.mxu0 0
  %1391 = vmatpush1.bf16.msra.mxu0 %v1087
  %1392 = vmatprep.subr.bf16.mxu0 0
  %1393 = vmatpush1.bf16.msra.mxu0 %v1086
  %1394 = vmatprep.subr.bf16.mxu0 0
  %1395 = vmatpush2.bf16.msra.mxu0 0
  %1396 = vmatprep.subr.bf16.mxu0 0
  %1397 = vmatpush2.bf16.msra.mxu0 0
  %1398 = vmatprep.subr.bf16.mxu0 0
  %1399 = vmatpush2.bf16.msra.mxu0 0
  %1400 = vmatprep.subr.bf16.mxu0 0
  %1401 = vmatpush2.bf16.msra.mxu0 0
  %1402 = vmatprep.subr.bf16.mxu0 0
  %1403 = vmatpush2.bf16.msra.mxu0 0
  %1404 = vmatprep.subr.bf16.mxu0 0
  %1405 = vmatpush2.bf16.msra.mxu0 0
  %1406 = vmatprep.subr.bf16.mxu0 0
  %1407 = vmatpush2.bf16.msra.mxu0 0
  %1408 = vmatprep.subr.bf16.mxu0 0
  %1409 = vmatpush2.bf16.msra.mxu0 0
  %1410 = vmatprep.mubr.bf16.mxu0 0
  %1411 = vmatmul.mubr.bf16.gmra.mxu0 %v1376
  %v1412 = vpop.f32.mrf.mxu0
  %v1413 = vadd.f32 %v1371, %v1412
  %v1414 = vpop.f32.mrf.mxu0
  %v1415 = vpop.f32.mrf.mxu0
  %v1416 = vpop.f32.mrf.mxu0
  %1417 = vdwg.mxu0
  %v1418 = vxor.u32 %v1413, 2147483648
  %v1419 = vmul.f32 %v1418, 1.442695
  %v1420 = vpow.pop %v1419
  %v1421 = vadd.f32 %v1420, 1.0
  %v1422 = vrcp.pop %v1421
  %v1423 = vmul.f32 1.0, %v1422
  %v1424 = vtanh.pop %v1413
  %v1425 = vmul.f32 %v1423, %v1363
  %1427 = vrot.lane.b32.xlu0 %v1424, 32
  %v1428 = vpop.permute.xlu0 %1427
  %v1430 = vmul.f32 %v1423, %v1428
  %1432 = vrot.lane.b32.xlu0 %v1430, 32
  %v1433 = vpop.permute.xlu0 %1432
  %v1435 = vadd.f32 %v1425, %v1433
  %v1436 = vtanh.pop %v1435
  %1438 = vrot.lane.b32.xlu0 %v1436, 32
  %v1439 = vpop.permute.xlu0 %1438
  %v1441 = vmul.f32 %v1423, %v1439
  %v1442 = vpack.c.bf16 %v1441, %v1441
  %v1443 = vld [vmem:[%s653] sm:$0xff]
  %1445 = vrot.lane.b32.xlu0 %v1442, 64
  %v1446 = vpop.permute.xlu0 %1445
  %v1448 = vsel %vm188, %v1446, 0
  %1450 = vmatprep.subr.bf16.mxu0 0
  %1451 = vmatpush1.bf16.msra.mxu0 0
  %1452 = vmatprep.subr.bf16.mxu0 0
  %1453 = vmatpush1.bf16.msra.mxu0 0
  %1454 = vmatprep.subr.bf16.mxu0 0
  %1455 = vmatpush1.bf16.msra.mxu0 0
  %1456 = vmatprep.subr.bf16.mxu0 0
  %1457 = vmatpush1.bf16.msra.mxu0 0
  %1458 = vmatprep.subr.bf16.mxu0 0
  %1459 = vmatpush1.bf16.msra.mxu0 0
  %1460 = vmatprep.subr.bf16.mxu0 0
  %1461 = vmatpush1.bf16.msra.mxu0 0
  %1462 = vmatprep.subr.bf16.mxu0 0
  %1463 = vmatpush1.bf16.msra.mxu0 %v1087
  %1464 = vmatprep.subr.bf16.mxu0 0
  %1465 = vmatpush1.bf16.msra.mxu0 %v1086
  %1466 = vmatprep.subr.bf16.mxu0 0
  %1467 = vmatpush2.bf16.msra.mxu0 0
  %1468 = vmatprep.subr.bf16.mxu0 0
  %1469 = vmatpush2.bf16.msra.mxu0 0
  %1470 = vmatprep.subr.bf16.mxu0 0
  %1471 = vmatpush2.bf16.msra.mxu0 0
  %1472 = vmatprep.subr.bf16.mxu0 0
  %1473 = vmatpush2.bf16.msra.mxu0 0
  %1474 = vmatprep.subr.bf16.mxu0 0
  %1475 = vmatpush2.bf16.msra.mxu0 0
  %1476 = vmatprep.subr.bf16.mxu0 0
  %1477 = vmatpush2.bf16.msra.mxu0 0
  %1478 = vmatprep.subr.bf16.mxu0 0
  %1479 = vmatpush2.bf16.msra.mxu0 0
  %1480 = vmatprep.subr.bf16.mxu0 0
  %1481 = vmatpush2.bf16.msra.mxu0 0
  %1482 = vmatprep.mubr.bf16.mxu0 0
  %1483 = vmatmul.mubr.bf16.gmra.mxu0 %v1448
  %v1484 = vpop.f32.mrf.mxu0
  %v1485 = vadd.f32 %v1443, %v1484
  %v1486 = vpop.f32.mrf.mxu0
  %v1487 = vpop.f32.mrf.mxu0
  %v1488 = vpop.f32.mrf.mxu0
  %1489 = vdwg.mxu0
  %v1490 = vxor.u32 %v1485, 2147483648
  %v1491 = vmul.f32 %v1490, 1.442695
  %v1492 = vpow.pop %v1491
  %v1493 = vadd.f32 %v1492, 1.0
  %v1494 = vrcp.pop %v1493
  %v1495 = vmul.f32 1.0, %v1494
  %v1496 = vtanh.pop %v1485
  %v1497 = vmul.f32 %v1495, %v1435
  %1499 = vrot.lane.b32.xlu0 %v1496, 32
  %v1500 = vpop.permute.xlu0 %1499
  %v1502 = vmul.f32 %v1495, %v1500
  %1504 = vrot.lane.b32.xlu0 %v1502, 32
  %v1505 = vpop.permute.xlu0 %1504
  %v1507 = vadd.f32 %v1497, %v1505
  %v1508 = vtanh.pop %v1507
  %1510 = vrot.lane.b32.xlu0 %v1508, 32
  %v1511 = vpop.permute.xlu0 %1510
  %v1513 = vmul.f32 %v1495, %v1511
  %v1514 = vpack.c.bf16 %v1513, %v1513
  %v1515 = vld [vmem:[%s749] sm:$0xff]
  %1517 = vrot.lane.b32.xlu0 %v1514, 64
  %v1518 = vpop.permute.xlu0 %1517
  %v1520 = vsel %vm188, %v1518, 0
  %1522 = vmatprep.subr.bf16.mxu0 0
  %1523 = vmatpush1.bf16.msra.mxu0 0
  %1524 = vmatprep.subr.bf16.mxu0 0
  %1525 = vmatpush1.bf16.msra.mxu0 0
  %1526 = vmatprep.subr.bf16.mxu0 0
  %1527 = vmatpush1.bf16.msra.mxu0 0
  %1528 = vmatprep.subr.bf16.mxu0 0
  %1529 = vmatpush1.bf16.msra.mxu0 0
  %1530 = vmatprep.subr.bf16.mxu0 0
  %1531 = vmatpush1.bf16.msra.mxu0 0
  %1532 = vmatprep.subr.bf16.mxu0 0
  %1533 = vmatpush1.bf16.msra.mxu0 0
  %1534 = vmatprep.subr.bf16.mxu0 0
  %1535 = vmatpush1.bf16.msra.mxu0 %v1087
  %1536 = vmatprep.subr.bf16.mxu0 0
  %1537 = vmatpush1.bf16.msra.mxu0 %v1086
  %1538 = vmatprep.subr.bf16.mxu0 0
  %1539 = vmatpush2.bf16.msra.mxu0 0
  %1540 = vmatprep.subr.bf16.mxu0 0
  %1541 = vmatpush2.bf16.msra.mxu0 0
  %1542 = vmatprep.subr.bf16.mxu0 0
  %1543 = vmatpush2.bf16.msra.mxu0 0
  %1544 = vmatprep.subr.bf16.mxu0 0
  %1545 = vmatpush2.bf16.msra.mxu0 0
  %1546 = vmatprep.subr.bf16.mxu0 0
  %1547 = vmatpush2.bf16.msra.mxu0 0
  %1548 = vmatprep.subr.bf16.mxu0 0
  %1549 = vmatpush2.bf16.msra.mxu0 0
  %1550 = vmatprep.subr.bf16.mxu0 0
  %1551 = vmatpush2.bf16.msra.mxu0 0
  %1552 = vmatprep.subr.bf16.mxu0 0
  %1553 = vmatpush2.bf16.msra.mxu0 0
  %1554 = vmatprep.mubr.bf16.mxu0 0
  %1555 = vmatmul.mubr.bf16.gmra.mxu0 %v1520
  %v1556 = vpop.f32.mrf.mxu0
  %v1557 = vadd.f32 %v1515, %v1556
  %v1558 = vpop.f32.mrf.mxu0
  %v1559 = vpop.f32.mrf.mxu0
  %v1560 = vpop.f32.mrf.mxu0
  %1561 = vdwg.mxu0
  %v1562 = vxor.u32 %v1557, 2147483648
  %v1563 = vmul.f32 %v1562, 1.442695
  %v1564 = vpow.pop %v1563
  %v1565 = vadd.f32 %v1564, 1.0
  %v1566 = vrcp.pop %v1565
  %v1567 = vmul.f32 1.0, %v1566
  %v1568 = vtanh.pop %v1557
  %v1569 = vmul.f32 %v1567, %v1507
  %1571 = vrot.lane.b32.xlu0 %v1568, 32
  %v1572 = vpop.permute.xlu0 %1571
  %v1574 = vmul.f32 %v1567, %v1572
  %1576 = vrot.lane.b32.xlu0 %v1574, 32
  %v1577 = vpop.permute.xlu0 %1576
  %v1579 = vadd.f32 %v1569, %v1577
  %v1580 = vtanh.pop %v1579
  %1582 = vrot.lane.b32.xlu0 %v1580, 32
  %v1583 = vpop.permute.xlu0 %1582
  %v1585 = vmul.f32 %v1567, %v1583
  %v1586 = vpack.c.bf16 %v1585, %v1585
  %v1587 = vld [vmem:[%s845] sm:$0xff]
  %1589 = vrot.lane.b32.xlu0 %v1586, 64
  %v1590 = vpop.permute.xlu0 %1589
  %v1592 = vsel %vm188, %v1590, 0
  %1594 = vmatprep.subr.bf16.mxu0 0
  %1595 = vmatpush1.bf16.msra.mxu0 0
  %1596 = vmatprep.subr.bf16.mxu0 0
  %1597 = vmatpush1.bf16.msra.mxu0 0
  %1598 = vmatprep.subr.bf16.mxu0 0
  %1599 = vmatpush1.bf16.msra.mxu0 0
  %1600 = vmatprep.subr.bf16.mxu0 0
  %1601 = vmatpush1.bf16.msra.mxu0 0
  %1602 = vmatprep.subr.bf16.mxu0 0
  %1603 = vmatpush1.bf16.msra.mxu0 0
  %1604 = vmatprep.subr.bf16.mxu0 0
  %1605 = vmatpush1.bf16.msra.mxu0 0
  %1606 = vmatprep.subr.bf16.mxu0 0
  %1607 = vmatpush1.bf16.msra.mxu0 %v1087
  %1608 = vmatprep.subr.bf16.mxu0 0
  %1609 = vmatpush1.bf16.msra.mxu0 %v1086
  %1610 = vmatprep.subr.bf16.mxu0 0
  %1611 = vmatpush2.bf16.msra.mxu0 0
  %1612 = vmatprep.subr.bf16.mxu0 0
  %1613 = vmatpush2.bf16.msra.mxu0 0
  %1614 = vmatprep.subr.bf16.mxu0 0
  %1615 = vmatpush2.bf16.msra.mxu0 0
  %1616 = vmatprep.subr.bf16.mxu0 0
  %1617 = vmatpush2.bf16.msra.mxu0 0
  %1618 = vmatprep.subr.bf16.mxu0 0
  %1619 = vmatpush2.bf16.msra.mxu0 0
  %1620 = vmatprep.subr.bf16.mxu0 0
  %1621 = vmatpush2.bf16.msra.mxu0 0
  %1622 = vmatprep.subr.bf16.mxu0 0
  %1623 = vmatpush2.bf16.msra.mxu0 0
  %1624 = vmatprep.subr.bf16.mxu0 0
  %1625 = vmatpush2.bf16.msra.mxu0 0
  %1626 = vmatprep.mubr.bf16.mxu0 0
  %1627 = vmatmul.mubr.bf16.gmra.mxu0 %v1592
  %v1628 = vpop.f32.mrf.mxu0
  %v1629 = vadd.f32 %v1587, %v1628
  %v1630 = vpop.f32.mrf.mxu0
  %v1631 = vpop.f32.mrf.mxu0
  %v1632 = vpop.f32.mrf.mxu0
  %1633 = vdwg.mxu0
  %v1634 = vxor.u32 %v1629, 2147483648
  %v1635 = vmul.f32 %v1634, 1.442695
  %v1636 = vpow.pop %v1635
  %v1637 = vadd.f32 %v1636, 1.0
  %v1638 = vrcp.pop %v1637
  %v1639 = vmul.f32 1.0, %v1638
  %v1640 = vtanh.pop %v1629
  %v1641 = vmul.f32 %v1639, %v1579
  %1643 = vrot.lane.b32.xlu0 %v1640, 32
  %v1644 = vpop.permute.xlu0 %1643
  %v1646 = vmul.f32 %v1639, %v1644
  %1648 = vrot.lane.b32.xlu0 %v1646, 32
  %v1649 = vpop.permute.xlu0 %1648
  %v1651 = vadd.f32 %v1641, %v1649
  %v1652 = vtanh.pop %v1651
  %1654 = vrot.lane.b32.xlu0 %v1652, 32
  %v1655 = vpop.permute.xlu0 %1654
  %v1657 = vmul.f32 %v1639, %v1655
  %v1658 = vpack.c.bf16 %v1657, %v1657
  %v1659 = vld [vmem:[%s7] sm:$0xf]
  %v1660 = vld [vmem:[%s7 + $0x4] sm:$0xf]
  %v1661 = vld [vmem:[%s7 + $0x8] sm:$0xf]
  %v1662 = vld [vmem:[%s7 + $0xc] sm:$0xf]
  %v1663 = vld [vmem:[%s8] sm:$0x1]
  %v1665 = vlaneseq
  %v1666 = vshrl.u32 %v1665, 7
  %v1667 = vsub.s32 0, %v1666
  %v1668 = vrot.slane %v1663, %v1667
  %1671 = vrot.lane.b32.xlu0 %v1658, 64
  %v1672 = vpop.permute.xlu0 %1671
  %v1677 = vunpack.c.l.b16 %v1659
  %v1678 = vunpack.c.l.b16 %v1660
  %v1679 = vunpack.c.l.b16 %v1661
  %v1680 = vunpack.c.l.b16 %v1662
  %v1681 = vpack.c.b16 %v1678, %v1677
  %v1682 = vpack.c.b16 %v1680, %v1679
  %v1686 = vsel %vm188, %v1672, 0
  %1688 = vmatprep.subr.bf16.mxu0 0
  %1689 = vmatpush1.bf16.msra.mxu0 0
  %1690 = vmatprep.subr.bf16.mxu0 0
  %1691 = vmatpush1.bf16.msra.mxu0 0
  %1692 = vmatprep.subr.bf16.mxu0 0
  %1693 = vmatpush1.bf16.msra.mxu0 0
  %1694 = vmatprep.subr.bf16.mxu0 0
  %1695 = vmatpush1.bf16.msra.mxu0 0
  %1696 = vmatprep.subr.bf16.mxu0 0
  %1697 = vmatpush1.bf16.msra.mxu0 0
  %1698 = vmatprep.subr.bf16.mxu0 0
  %1699 = vmatpush1.bf16.msra.mxu0 0
  %1700 = vmatprep.subr.bf16.mxu0 0
  %1701 = vmatpush1.bf16.msra.mxu0 %v1682
  %1702 = vmatprep.subr.bf16.mxu0 0
  %1703 = vmatpush1.bf16.msra.mxu0 %v1681
  %1704 = vmatprep.subr.bf16.mxu0 0
  %1705 = vmatpush2.bf16.msra.mxu0 0
  %1706 = vmatprep.subr.bf16.mxu0 0
  %1707 = vmatpush2.bf16.msra.mxu0 0
  %1708 = vmatprep.subr.bf16.mxu0 0
  %1709 = vmatpush2.bf16.msra.mxu0 0
  %1710 = vmatprep.subr.bf16.mxu0 0
  %1711 = vmatpush2.bf16.msra.mxu0 0
  %1712 = vmatprep.subr.bf16.mxu0 0
  %1713 = vmatpush2.bf16.msra.mxu0 0
  %1714 = vmatprep.subr.bf16.mxu0 0
  %1715 = vmatpush2.bf16.msra.mxu0 0
  %1716 = vmatprep.subr.bf16.mxu0 0
  %1717 = vmatpush2.bf16.msra.mxu0 0
  %1718 = vmatprep.subr.bf16.mxu0 0
  %1719 = vmatpush2.bf16.msra.mxu0 0
  %1720 = vmatprep.mubr.bf16.mxu0 0
  %1721 = vmatmul.mubr.bf16.gmra.mxu0 %v1686
  %v1722 = vpop.f32.mrf.mxu0
  %v1723 = vadd.f32 %v1668, %v1722
  %v1724 = vpop.f32.mrf.mxu0
  %v1725 = vpop.f32.mrf.mxu0
  %v1726 = vpop.f32.mrf.mxu0
  %1727 = vdwg.mxu0
  %v1728 = vmul.f32 %v1723, %v1723
  %v1729 = vpack.c.bf16 %v1728, %v1728
  %v1730 = vld [vmem:[%s9] sm:$0x3]
  %v1731 = vld [vmem:[%s10] sm:$0x1]
  %v1733 = vlaneseq
  %v1734 = vshrl.u32 %v1733, 7
  %v1735 = vsub.s32 0, %v1734
  %v1736 = vrot.slane %v1731, %v1735
  %vm1738 = vcmask 31744
  %v1740 = vsel %vm1738, %v1729, 0
  %vm1742 = vcmask 1041408
  %v1744 = vsel %vm1742, %v1730, 0
  %1746 = vmatprep.subr.bf16.mxu0 0
  %1747 = vmatpush1.bf16.msra.mxu0 0
  %1748 = vmatprep.subr.bf16.mxu0 0
  %1749 = vmatpush1.bf16.msra.mxu0 0
  %1750 = vmatprep.subr.bf16.mxu0 0
  %1751 = vmatpush1.bf16.msra.mxu0 0
  %1752 = vmatprep.subr.bf16.mxu0 0
  %1753 = vmatpush1.bf16.msra.mxu0 0
  %1754 = vmatprep.subr.bf16.mxu0 0
  %1755 = vmatpush1.bf16.msra.mxu0 0
  %1756 = vmatprep.subr.bf16.mxu0 0
  %1757 = vmatpush1.bf16.msra.mxu0 0
  %1758 = vmatprep.subr.bf16.mxu0 0
  %1759 = vmatpush1.bf16.msra.mxu0 0
  %1760 = vmatprep.subr.bf16.mxu0 0
  %1761 = vmatpush1.bf16.msra.mxu0 %v1744
  %1762 = vmatprep.subr.bf16.mxu0 0
  %1763 = vmatpush2.bf16.msra.mxu0 0
  %1764 = vmatprep.subr.bf16.mxu0 0
  %1765 = vmatpush2.bf16.msra.mxu0 0
  %1766 = vmatprep.subr.bf16.mxu0 0
  %1767 = vmatpush2.bf16.msra.mxu0 0
  %1768 = vmatprep.subr.bf16.mxu0 0
  %1769 = vmatpush2.bf16.msra.mxu0 0
  %1770 = vmatprep.subr.bf16.mxu0 0
  %1771 = vmatpush2.bf16.msra.mxu0 0
  %1772 = vmatprep.subr.bf16.mxu0 0
  %1773 = vmatpush2.bf16.msra.mxu0 0
  %1774 = vmatprep.subr.bf16.mxu0 0
  %1775 = vmatpush2.bf16.msra.mxu0 0
  %1776 = vmatprep.subr.bf16.mxu0 0
  %1777 = vmatpush2.bf16.msra.mxu0 0
  %1778 = vmatprep.mubr.bf16.mxu0 0
  %1779 = vmatmul.mubr.bf16.gmra.mxu0 %v1740
  %v1780 = vpop.f32.mrf.mxu0
  %v1781 = vadd.f32 %v1736, %v1780
  %v1782 = vpop.f32.mrf.mxu0
  %v1783 = vpop.f32.mrf.mxu0
  %v1784 = vpop.f32.mrf.mxu0
  %1785 = vdwg.mxu0
  %v1786 = vmul.f32 %v1728, %v1723
  %v1787 = vpack.c.bf16 %v1786, %v1786
  %v1788 = vld [vmem:[%s11] sm:$0x3]
  %v1789 = vld [vmem:[%s12] sm:$0x1]
  %v1791 = vlaneseq
  %v1792 = vshrl.u32 %v1791, 7
  %v1793 = vsub.s32 0, %v1792
  %v1794 = vrot.slane %v1789, %v1793
  %v1797 = vsel %vm1738, %v1787, 0
  %v1800 = vsel %vm1742, %v1788, 0
  %1802 = vmatprep.subr.bf16.mxu0 0
  %1803 = vmatpush1.bf16.msra.mxu0 0
  %1804 = vmatprep.subr.bf16.mxu0 0
  %1805 = vmatpush1.bf16.msra.mxu0 0
  %1806 = vmatprep.subr.bf16.mxu0 0
  %1807 = vmatpush1.bf16.msra.mxu0 0
  %1808 = vmatprep.subr.bf16.mxu0 0
  %1809 = vmatpush1.bf16.msra.mxu0 0
  %1810 = vmatprep.subr.bf16.mxu0 0
  %1811 = vmatpush1.bf16.msra.mxu0 0
  %1812 = vmatprep.subr.bf16.mxu0 0
  %1813 = vmatpush1.bf16.msra.mxu0 0
  %1814 = vmatprep.subr.bf16.mxu0 0
  %1815 = vmatpush1.bf16.msra.mxu0 0
  %1816 = vmatprep.subr.bf16.mxu0 0
  %1817 = vmatpush1.bf16.msra.mxu0 %v1800
  %1818 = vmatprep.subr.bf16.mxu0 0
  %1819 = vmatpush2.bf16.msra.mxu0 0
  %1820 = vmatprep.subr.bf16.mxu0 0
  %1821 = vmatpush2.bf16.msra.mxu0 0
  %1822 = vmatprep.subr.bf16.mxu0 0
  %1823 = vmatpush2.bf16.msra.mxu0 0
  %1824 = vmatprep.subr.bf16.mxu0 0
  %1825 = vmatpush2.bf16.msra.mxu0 0
  %1826 = vmatprep.subr.bf16.mxu0 0
  %1827 = vmatpush2.bf16.msra.mxu0 0
  %1828 = vmatprep.subr.bf16.mxu0 0
  %1829 = vmatpush2.bf16.msra.mxu0 0
  %1830 = vmatprep.subr.bf16.mxu0 0
  %1831 = vmatpush2.bf16.msra.mxu0 0
  %1832 = vmatprep.subr.bf16.mxu0 0
  %1833 = vmatpush2.bf16.msra.mxu0 0
  %1834 = vmatprep.mubr.bf16.mxu0 0
  %1835 = vmatmul.mubr.bf16.gmra.mxu0 %v1797
  %v1836 = vpop.f32.mrf.mxu0
  %v1837 = vadd.f32 %v1794, %v1836
  %v1838 = vpop.f32.mrf.mxu0
  %v1839 = vpop.f32.mrf.mxu0
  %v1840 = vpop.f32.mrf.mxu0
  %1841 = vdwg.mxu0
  %v1842 = vadd.f32 %v1723, %v1781
  %v1843 = vadd.f32 %v1842, %v1837
  %1844 = vst.msk [vmem:[%s13] sm:$0xff] %vm1738, %v1843
  // Predicated region
  $region54: #{lstm_model_forward.1} parent=0 // pred_check
    _
  $region55: #{lstm_model_forward.1} parent=0 // pred_check_branch
    %1846 = sbr.rel (0) target = $region57
  $region56: #{lstm_model_forward.1} parent=0 // pred_region
    _
  $region57: #{lstm_model_forward.1} parent=0 // pred_fallthru
    _
  // Predicated region
  $region58: #{lstm_model_forward.1} parent=0 // pred_check
    _
  $region59: #{lstm_model_forward.1} parent=0 // pred_check_branch
    %1848 = sbr.rel (0) target = $region61
  $region60: #{lstm_model_forward.1} parent=0 // pred_region
    _
  $region61: #{lstm_model_forward.1} parent=0 // pred_fallthru
    _

</llo_original>
